<compile_context>
chip_gen: v6e
topology: v6e:2x2x1
jax: 0.10.0
libtpu: 0.0.40
codegen_flags: <defaults>
</compile_context>

<pallas_src>
import jax
import jax.numpy as jnp
from jax import lax
from jax.experimental import pallas as pl
from jax.experimental.pallas import tpu as pltpu


def fused_nonlocal_kernel(x_ref, wstk_ref, bstk_ref, ww_ref, wb_ref,
                          gamma_ref, beta_ref, z_ref,
                          s_vmem, sum_vmem, sq_vmem):
    i = pl.program_id(0)
    nb = pl.num_programs(0)
    b_blk = x_ref.shape[0]                 # batches per grid step (static)
    B = s_vmem.shape[0]                    # total batches (static)
    T = s_vmem.shape[-1]
    ci = wstk_ref.shape[0] // 3

    @pl.when(i == 0)
    def _():
        sum_vmem[...] = jnp.zeros_like(sum_vmem)
        sq_vmem[...] = jnp.zeros_like(sq_vmem)

    # Hoisted bf16 weight casts (shared by every batch in the block).
    wstk_b = wstk_ref[...].astype(jnp.bfloat16)            # (3Ci, C)
    ww_b = ww_ref[...].astype(jnp.bfloat16)                # (C, Ci)

    for bb in range(b_blk):                                # static, unrolled
        x = x_ref[bb]                                      # (C, T)

        # Fused theta/phi/g 1x1 convs: one (3Ci, C) @ (C, T) bf16 MXU push.
        proj = jnp.dot(wstk_b, x.astype(jnp.bfloat16),
                       preferred_element_type=jnp.float32) + bstk_ref[...]
        theta_x = proj[0:ci]                               # (Ci, T)
        phi_x = proj[ci:2 * ci]                            # (Ci, T)
        g_x = proj[2 * ci:3 * ci]                          # (Ci, T)

        # f[t1, t2] = sum_c theta[c, t1] * phi[c, t2]  -> (T, T)
        f = lax.dot_general(theta_x.astype(jnp.bfloat16),
                            phi_x.astype(jnp.bfloat16),
                            (((0,), (0,)), ((), ())),
                            preferred_element_type=jnp.float32)

        # Softmax numerator; exp stays f32 (portable to v5e: no bf16 EUP).
        m = jnp.max(f, axis=-1, keepdims=True)             # (T, 1)
        e = jnp.exp(f - m)                                 # (T, T) f32
        l = jnp.sum(e, axis=-1, keepdims=True)             # (T, 1)

        # y[t1, c] = sum_t2 e[t1, t2] * g[c, t2]  -> (T, Ci); e is bf16 MXU LHS.
        y = lax.dot_general(e.astype(jnp.bfloat16),
                            g_x.astype(jnp.bfloat16),
                            (((1,), (1,)), ((), ())),
                            preferred_element_type=jnp.float32)
        y = y * pl.reciprocal(l, approx=True)              # fold softmax denom

        # w_y[c, t] = sum_i ww[c, i] * y[t, i]  -> (C, T)
        w_y = lax.dot_general(ww_b, y.astype(jnp.bfloat16),
                              (((1,), (1,)), ((), ())),
                              preferred_element_type=jnp.float32) + wb_ref[...]

        s = w_y + x.astype(jnp.float32)                    # residual, f32
        s_vmem[i * b_blk + bb] = s                         # keep resident in VMEM

        # BatchNorm partial stats, f32 accumulation across the whole grid.
        sum_vmem[...] += jnp.sum(s, axis=-1, keepdims=True)
        sq_vmem[...] += jnp.sum(s * s, axis=-1, keepdims=True)

    @pl.when(i == nb - 1)
    def _():
        cnt = float(B * T)
        mean = sum_vmem[...] / cnt                         # (C, 1)
        var = jnp.maximum(sq_vmem[...] / cnt - mean * mean, 0.0)
        inv = lax.rsqrt(var + 1e-5)
        scale = gamma_ref[...] * inv                       # (C, 1)
        shift = beta_ref[...] - mean * scale               # (C, 1)
        for b in range(B):                                 # static, unrolled
            z_ref[b] = (s_vmem[b] * scale + shift).astype(z_ref.dtype)


def nonlocal_block(x, params):
    (gw, gb, tw, tb, pw, pb, ww, wb, gamma, beta) = params
    B, C, T = x.shape
    Ci = C // 2
    assert 2 * Ci == C
    # Packed theta/phi/g slices must stay (8,128)-tile aligned (f32 sublanes).
    assert Ci % 8 == 0, "Ci must be a multiple of 8 for tile-aligned proj slices"
    # Full s (and z) kept resident in VMEM — keep well under v7x's 64 MiB.
    assert B * C * T * 4 <= 24 * 1024 * 1024, \
        "B*C*T too large for fused VMEM residency; use the two-pass variant"

    # Batches per grid step (amortizes per-step overhead).
    B_BLK = max(d for d in (8, 4, 2, 1) if B % d == 0)
    nb = B // B_BLK

    # Pack the three projection weights/biases once (wrapper-side, tiny).
    wstk = jnp.concatenate([tw, pw, gw], axis=0)           # (3Ci, C)
    bstk = jnp.concatenate([tb, pb, gb], axis=0)           # (3Ci, 1)
    gamma2 = gamma.reshape(C, 1)
    beta2 = beta.reshape(C, 1)

    # VMEM budget: actual footprint with margin, capped at 48 MiB (v7x-safe).
    itemsize = jnp.dtype(x.dtype).itemsize
    est = (B * C * T * 4                       # s scratch (f32)
           + 2 * B * C * T * itemsize          # resident z output
           + 2 * B_BLK * C * T * itemsize      # double-buffered x blocks
           + T * T * 12                        # f/e intermediates
           + (3 * Ci * C + 3 * Ci + C * Ci + 4 * C) * 8)
    vmem_limit = int(min(max(4 * est, 8 * 1024 * 1024), 48 * 1024 * 1024))

    wmap = lambda i: (0, 0)
    z = pl.pallas_call(
        fused_nonlocal_kernel,
        out_shape=jax.ShapeDtypeStruct((B, C, T), x.dtype),
        grid=(nb,),
        in_specs=[
            pl.BlockSpec((B_BLK, C, T), lambda i: (i, 0, 0)),  # x batch block
            pl.BlockSpec((3 * Ci, C), wmap),                   # packed theta/phi/g weight
            pl.BlockSpec((3 * Ci, 1), wmap),                   # packed bias
            pl.BlockSpec((C, Ci), wmap),                       # W weight
            pl.BlockSpec((C, 1), wmap),                        # W bias
            pl.BlockSpec((C, 1), wmap),                        # BN gamma
            pl.BlockSpec((C, 1), wmap),                        # BN beta
        ],
        # Output block constant across the grid -> resident, written once.
        out_specs=pl.BlockSpec((B, C, T), lambda i: (0, 0, 0)),
        scratch_shapes=[
            pltpu.VMEM((B, C, T), jnp.float32),   # s (residual, f32)
            pltpu.VMEM((C, 1), jnp.float32),      # sum_c
            pltpu.VMEM((C, 1), jnp.float32),      # sumsq_c
        ],
        compiler_params=pltpu.CompilerParams(
            dimension_semantics=("arbitrary",),   # stats carry across steps
            vmem_limit_bytes=vmem_limit),
    )(x, wstk, bstk, ww, wb, gamma2, beta2)
    return z


def nonlocal_block_ref(x, params):
    """Pure-JAX reference mirroring the PyTorch forward (training-mode BN)."""
    (gw, gb, tw, tb, pw, pb, ww, wb, gamma, beta) = params
    g_x = jnp.einsum('oc,bct->bot', gw, x) + gb[None]      # (B, Ci, T)
    theta_x = jnp.einsum('oc,bct->bot', tw, x) + tb[None]  # (B, Ci, T)
    phi_x = jnp.einsum('oc,bct->bot', pw, x) + pb[None]    # (B, Ci, T)
    f = jnp.einsum('bct,bcs->bts', theta_x, phi_x)         # (B, T, T)
    f_div = jax.nn.softmax(f, axis=-1)
    y_t = jnp.einsum('bcs,bts->bct', g_x, f_div)           # (B, Ci, T)
    w_y = jnp.einsum('oc,bct->bot', ww, y_t) + wb[None]    # (B, C, T)
    s = w_y + x
    m = jnp.mean(s, axis=(0, 2), keepdims=True)
    v = jnp.mean((s - m) ** 2, axis=(0, 2), keepdims=True)
    return gamma * (s - m) / jnp.sqrt(v + 1e-5) + beta


if __name__ == "__main__":
    # Lane-dense test shape: T = 128 (unmasked stores), Ci = 8 (sublane-aligned
    # slices of the stacked projection).
    B, C, T = 2, 16, 128
    Ci = C // 2

    key = jax.random.PRNGKey(0)
    ks = jax.random.split(key, 11)
    x = jax.random.normal(ks[0], (B, C, T), dtype=jnp.float32)

    # Deterministic synthetic parameters (Conv1d k=1 weights flattened to 2D).
    gw = 0.1 * jax.random.normal(ks[1], (Ci, C), dtype=jnp.float32)
    gb = 0.1 * jax.random.normal(ks[2], (Ci, 1), dtype=jnp.float32)
    tw = 0.1 * jax.random.normal(ks[3], (Ci, C), dtype=jnp.float32)
    tb = 0.1 * jax.random.normal(ks[4], (Ci, 1), dtype=jnp.float32)
    pw = 0.1 * jax.random.normal(ks[5], (Ci, C), dtype=jnp.float32)
    pb = 0.1 * jax.random.normal(ks[6], (Ci, 1), dtype=jnp.float32)
    ww = 0.1 * jax.random.normal(ks[7], (C, Ci), dtype=jnp.float32)
    wb = 0.1 * jax.random.normal(ks[8], (C, 1), dtype=jnp.float32)
    gamma = 1.0 + 0.1 * jax.random.normal(ks[9], (1, C, 1), dtype=jnp.float32)
    beta = 0.1 * jax.random.normal(ks[10], (1, C, 1), dtype=jnp.float32)

    params = (gw, gb, tw, tb, pw, pb, ww, wb, gamma, beta)

    z = nonlocal_block(x, params)
    z = jax.block_until_ready(z)

    z_ref = nonlocal_block_ref(x, params)
    assert z.shape == (B, C, T)
    # Tolerance covers bf16 MXU operands + EUP approximate softmax reciprocal.
    assert jnp.allclose(z, z_ref, rtol=1e-2, atol=1e-2), "mismatch vs JAX reference"

    print("KERNEL_OK")
</pallas_src>

<mosaic_0001>
module attributes {stable_mosaic.version = 11 : i64} {
  func.func @fused_nonlocal_kernel(%arg0: i32, %arg1: memref<2x16x128xf32, #tpu.memory_space<vmem>>, %arg2: memref<24x16xf32, #tpu.memory_space<vmem>>, %arg3: memref<24x1xf32, #tpu.memory_space<vmem>>, %arg4: memref<16x8xf32, #tpu.memory_space<vmem>>, %arg5: memref<16x1xf32, #tpu.memory_space<vmem>>, %arg6: memref<16x1xf32, #tpu.memory_space<vmem>>, %arg7: memref<16x1xf32, #tpu.memory_space<vmem>>, %arg8: memref<2x16x128xf32, #tpu.memory_space<vmem>>, %arg9: memref<2x16x128xf32, #tpu.memory_space<vmem>>, %arg10: memref<16x1xf32, #tpu.memory_space<vmem>>, %arg11: memref<16x1xf32, #tpu.memory_space<vmem>>) attributes {dimension_semantics = [#tpu.dimension_semantics<arbitrary>], iteration_bounds = array<i64: 1>, scalar_prefetch = 0 : i64, scratch_operands = 3 : i64, tpu.core_type = #tpu.core_type<tc>, window_params = [{transform_indices = @transform_0, window_bounds = array<i64: 2, 16, 128>}, {pipeline_mode = #tpu.pipeline_mode<synchronous>, transform_indices = @transform_1, window_bounds = array<i64: 24, 16>}, {pipeline_mode = #tpu.pipeline_mode<synchronous>, transform_indices = @transform_2, window_bounds = array<i64: 24, 1>}, {pipeline_mode = #tpu.pipeline_mode<synchronous>, transform_indices = @transform_3, window_bounds = array<i64: 16, 8>}, {pipeline_mode = #tpu.pipeline_mode<synchronous>, transform_indices = @transform_4, window_bounds = array<i64: 16, 1>}, {pipeline_mode = #tpu.pipeline_mode<synchronous>, transform_indices = @transform_5, window_bounds = array<i64: 16, 1>}, {pipeline_mode = #tpu.pipeline_mode<synchronous>, transform_indices = @transform_6, window_bounds = array<i64: 16, 1>}, {pipeline_mode = #tpu.pipeline_mode<synchronous>, transform_indices = @transform_7, window_bounds = array<i64: 2, 16, 128>}]} {
    %c0_i32 = arith.constant 0 : i32
    %0 = arith.cmpi eq, %arg0, %c0_i32 : i32
    %1 = arith.extui %0 : i1 to i32
    %c0_i32_0 = arith.constant 0 : i32
    %2 = arith.cmpi ne, %1, %c0_i32_0 : i32
    scf.if %2 {
      %cst_56 = arith.constant 0.000000e+00 : f32
      %108 = vector.broadcast %cst_56 : f32 to vector<16x1xf32>
      %c0_57 = arith.constant 0 : index
      %c0_58 = arith.constant 0 : index
      %109 = vector.load %arg10[%c0_57, %c0_58] : memref<16x1xf32, #tpu.memory_space<vmem>>, vector<16x1xf32>
      tpu.vector_store %arg10[%c0_57, %c0_58], %108 {strides = array<i32>} : memref<16x1xf32, #tpu.memory_space<vmem>>, vector<16x1xf32>,
      %cst_59 = arith.constant 0.000000e+00 : f32
      %110 = vector.broadcast %cst_59 : f32 to vector<16x1xf32>
      %c0_60 = arith.constant 0 : index
      %c0_61 = arith.constant 0 : index
      %111 = vector.load %arg11[%c0_60, %c0_61] : memref<16x1xf32, #tpu.memory_space<vmem>>, vector<16x1xf32>
      tpu.vector_store %arg11[%c0_60, %c0_61], %110 {strides = array<i32>} : memref<16x1xf32, #tpu.memory_space<vmem>>, vector<16x1xf32>,
    } else {
    }
    %c0 = arith.constant 0 : index
    %c0_1 = arith.constant 0 : index
    %3 = vector.load %arg2[%c0, %c0_1] : memref<24x16xf32, #tpu.memory_space<vmem>>, vector<24x16xf32>
    %4 = arith.truncf %3 : vector<24x16xf32> to vector<24x16xbf16>
    %c0_2 = arith.constant 0 : index
    %c0_3 = arith.constant 0 : index
    %5 = vector.load %arg4[%c0_2, %c0_3] : memref<16x8xf32, #tpu.memory_space<vmem>>, vector<16x8xf32>
    %6 = arith.truncf %5 : vector<16x8xf32> to vector<16x8xbf16>
    %c0_4 = arith.constant 0 : index
    %c0_5 = arith.constant 0 : index
    %c0_6 = arith.constant 0 : index
    %7 = vector.load %arg1[%c0_4, %c0_5, %c0_6] : memref<2x16x128xf32, #tpu.memory_space<vmem>>, vector<1x16x128xf32>
    %8 = vector.shape_cast %7 : vector<1x16x128xf32> to vector<16x128xf32>
    %9 = arith.truncf %8 : vector<16x128xf32> to vector<16x128xbf16>
    %cst = arith.constant dense<0.000000e+00> : vector<24x128xf32>
    %10 = tpu.matmul %4, %9, %cst {dimension_numbers = #tpu.dot_dimension_numbers<[1], [0], [0], [1], [0, 0, 1, 1], [], []>} : vector<24x16xbf16>, vector<16x128xbf16>, vector<24x128xf32> -> vector<24x128xf32>
    %c0_7 = arith.constant 0 : index
    %c0_8 = arith.constant 0 : index
    %11 = vector.load %arg3[%c0_7, %c0_8] : memref<24x1xf32, #tpu.memory_space<vmem>>, vector<24x1xf32>
    %12 = vector.broadcast %11 : vector<24x1xf32> to vector<24x128xf32>
    %13 = arith.addf %10, %12 : vector<24x128xf32>
    %14 = vector.extract_strided_slice %13 {offsets = [0, 0], sizes = [8, 128], strides = [1, 1]} : vector<24x128xf32> to vector<8x128xf32>
    %15 = vector.extract_strided_slice %13 {offsets = [8, 0], sizes = [8, 128], strides = [1, 1]} : vector<24x128xf32> to vector<8x128xf32>
    %16 = vector.extract_strided_slice %13 {offsets = [16, 0], sizes = [8, 128], strides = [1, 1]} : vector<24x128xf32> to vector<8x128xf32>
    %17 = arith.truncf %14 : vector<8x128xf32> to vector<8x128xbf16>
    %18 = arith.truncf %15 : vector<8x128xf32> to vector<8x128xbf16>
    %cst_9 = arith.constant dense<0.000000e+00> : vector<128x128xf32>
    %19 = tpu.matmul %17, %18, %cst_9 {dimension_numbers = #tpu.dot_dimension_numbers<[0], [0], [1], [1], [0, 1, 1, 1], [], []>} : vector<8x128xbf16>, vector<8x128xbf16>, vector<128x128xf32> -> vector<128x128xf32>
    %cst_10 = arith.constant dense<0xFF800000> : vector<128xf32>
    %20 = vector.multi_reduction <maximumf>, %19, %cst_10 [1] : vector<128x128xf32> to vector<128xf32>
    %21 = vector.shape_cast %20 : vector<128xf32> to vector<128x1xf32>
    %22 = vector.broadcast %21 : vector<128x1xf32> to vector<128x128xf32>
    %23 = arith.subf %19, %22 : vector<128x128xf32>
    %24 = math.exp %23 : vector<128x128xf32>
    %cst_11 = arith.constant dense<0.000000e+00> : vector<128xf32>
    %25 = vector.multi_reduction <add>, %24, %cst_11 [1] : vector<128x128xf32> to vector<128xf32>
    %26 = vector.shape_cast %25 : vector<128xf32> to vector<128x1xf32>
    %27 = arith.truncf %24 : vector<128x128xf32> to vector<128x128xbf16>
    %28 = arith.truncf %16 : vector<8x128xf32> to vector<8x128xbf16>
    %cst_12 = arith.constant dense<0.000000e+00> : vector<128x8xf32>
    %29 = tpu.matmul %27, %28, %cst_12 {dimension_numbers = #tpu.dot_dimension_numbers<[1], [1], [0], [0], [0, 0, 1, 0], [], []>} : vector<128x128xbf16>, vector<8x128xbf16>, vector<128x8xf32> -> vector<128x8xf32>
    %30 = tpu.reciprocal %26 {approx = true} : vector<128x1xf32> -> vector<128x1xf32>
    %31 = vector.broadcast %30 : vector<128x1xf32> to vector<128x8xf32>
    %32 = arith.mulf %29, %31 : vector<128x8xf32>
    %33 = arith.truncf %32 : vector<128x8xf32> to vector<128x8xbf16>
    %cst_13 = arith.constant dense<0.000000e+00> : vector<16x128xf32>
    %34 = tpu.matmul %6, %33, %cst_13 {dimension_numbers = #tpu.dot_dimension_numbers<[1], [1], [0], [0], [0, 0, 1, 0], [], []>} : vector<16x8xbf16>, vector<128x8xbf16>, vector<16x128xf32> -> vector<16x128xf32>
    %c0_14 = arith.constant 0 : index
    %c0_15 = arith.constant 0 : index
    %35 = vector.load %arg5[%c0_14, %c0_15] : memref<16x1xf32, #tpu.memory_space<vmem>>, vector<16x1xf32>
    %36 = vector.broadcast %35 : vector<16x1xf32> to vector<16x128xf32>
    %37 = arith.addf %34, %36 : vector<16x128xf32>
    %38 = arith.addf %37, %8 : vector<16x128xf32>
    %c2_i32 = arith.constant 2 : i32
    %39 = arith.muli %arg0, %c2_i32 : i32
    %c0_i32_16 = arith.constant 0 : i32
    %40 = arith.addi %39, %c0_i32_16 : i32
    %41 = arith.index_cast %40 : i32 to index
    %c0_17 = arith.constant 0 : index
    %c0_18 = arith.constant 0 : index
    %42 = vector.load %arg9[%41, %c0_17, %c0_18] : memref<2x16x128xf32, #tpu.memory_space<vmem>>, vector<1x16x128xf32>
    %43 = vector.shape_cast %42 : vector<1x16x128xf32> to vector<16x128xf32>
    %44 = vector.shape_cast %38 : vector<16x128xf32> to vector<1x16x128xf32>
    tpu.vector_store %arg9[%41, %c0_17, %c0_18], %44 {strides = array<i32>} : memref<2x16x128xf32, #tpu.memory_space<vmem>>, vector<1x16x128xf32>,
    %c0_19 = arith.constant 0 : index
    %c0_20 = arith.constant 0 : index
    %45 = vector.load %arg10[%c0_19, %c0_20] : memref<16x1xf32, #tpu.memory_space<vmem>>, vector<16x1xf32>
    %cst_21 = arith.constant dense<0.000000e+00> : vector<16xf32>
    %46 = vector.multi_reduction <add>, %38, %cst_21 [1] : vector<16x128xf32> to vector<16xf32>
    %47 = vector.shape_cast %46 : vector<16xf32> to vector<16x1xf32>
    %48 = arith.addf %45, %47 : vector<16x1xf32>
    %c0_22 = arith.constant 0 : index
    %c0_23 = arith.constant 0 : index
    %49 = vector.load %arg10[%c0_22, %c0_23] : memref<16x1xf32, #tpu.memory_space<vmem>>, vector<16x1xf32>
    tpu.vector_store %arg10[%c0_22, %c0_23], %48 {strides = array<i32>} : memref<16x1xf32, #tpu.memory_space<vmem>>, vector<16x1xf32>,
    %c0_24 = arith.constant 0 : index
    %c0_25 = arith.constant 0 : index
    %50 = vector.load %arg11[%c0_24, %c0_25] : memref<16x1xf32, #tpu.memory_space<vmem>>, vector<16x1xf32>
    %51 = arith.mulf %38, %38 : vector<16x128xf32>
    %cst_26 = arith.constant dense<0.000000e+00> : vector<16xf32>
    %52 = vector.multi_reduction <add>, %51, %cst_26 [1] : vector<16x128xf32> to vector<16xf32>
    %53 = vector.shape_cast %52 : vector<16xf32> to vector<16x1xf32>
    %54 = arith.addf %50, %53 : vector<16x1xf32>
    %c0_27 = arith.constant 0 : index
    %c0_28 = arith.constant 0 : index
    %55 = vector.load %arg11[%c0_27, %c0_28] : memref<16x1xf32, #tpu.memory_space<vmem>>, vector<16x1xf32>
    tpu.vector_store %arg11[%c0_27, %c0_28], %54 {strides = array<i32>} : memref<16x1xf32, #tpu.memory_space<vmem>>, vector<16x1xf32>,
    %c1 = arith.constant 1 : index
    %c0_29 = arith.constant 0 : index
    %c0_30 = arith.constant 0 : index
    %56 = vector.load %arg1[%c1, %c0_29, %c0_30] : memref<2x16x128xf32, #tpu.memory_space<vmem>>, vector<1x16x128xf32>
    %57 = vector.shape_cast %56 : vector<1x16x128xf32> to vector<16x128xf32>
    %58 = arith.truncf %57 : vector<16x128xf32> to vector<16x128xbf16>
    %cst_31 = arith.constant dense<0.000000e+00> : vector<24x128xf32>
    %59 = tpu.matmul %4, %58, %cst_31 {dimension_numbers = #tpu.dot_dimension_numbers<[1], [0], [0], [1], [0, 0, 1, 1], [], []>} : vector<24x16xbf16>, vector<16x128xbf16>, vector<24x128xf32> -> vector<24x128xf32>
    %c0_32 = arith.constant 0 : index
    %c0_33 = arith.constant 0 : index
    %60 = vector.load %arg3[%c0_32, %c0_33] : memref<24x1xf32, #tpu.memory_space<vmem>>, vector<24x1xf32>
    %61 = vector.broadcast %60 : vector<24x1xf32> to vector<24x128xf32>
    %62 = arith.addf %59, %61 : vector<24x128xf32>
    %63 = vector.extract_strided_slice %62 {offsets = [0, 0], sizes = [8, 128], strides = [1, 1]} : vector<24x128xf32> to vector<8x128xf32>
    %64 = vector.extract_strided_slice %62 {offsets = [8, 0], sizes = [8, 128], strides = [1, 1]} : vector<24x128xf32> to vector<8x128xf32>
    %65 = vector.extract_strided_slice %62 {offsets = [16, 0], sizes = [8, 128], strides = [1, 1]} : vector<24x128xf32> to vector<8x128xf32>
    %66 = arith.truncf %63 : vector<8x128xf32> to vector<8x128xbf16>
    %67 = arith.truncf %64 : vector<8x128xf32> to vector<8x128xbf16>
    %cst_34 = arith.constant dense<0.000000e+00> : vector<128x128xf32>
    %68 = tpu.matmul %66, %67, %cst_34 {dimension_numbers = #tpu.dot_dimension_numbers<[0], [0], [1], [1], [0, 1, 1, 1], [], []>} : vector<8x128xbf16>, vector<8x128xbf16>, vector<128x128xf32> -> vector<128x128xf32>
    %cst_35 = arith.constant dense<0xFF800000> : vector<128xf32>
    %69 = vector.multi_reduction <maximumf>, %68, %cst_35 [1] : vector<128x128xf32> to vector<128xf32>
    %70 = vector.shape_cast %69 : vector<128xf32> to vector<128x1xf32>
    %71 = vector.broadcast %70 : vector<128x1xf32> to vector<128x128xf32>
    %72 = arith.subf %68, %71 : vector<128x128xf32>
    %73 = math.exp %72 : vector<128x128xf32>
    %cst_36 = arith.constant dense<0.000000e+00> : vector<128xf32>
    %74 = vector.multi_reduction <add>, %73, %cst_36 [1] : vector<128x128xf32> to vector<128xf32>
    %75 = vector.shape_cast %74 : vector<128xf32> to vector<128x1xf32>
    %76 = arith.truncf %73 : vector<128x128xf32> to vector<128x128xbf16>
    %77 = arith.truncf %65 : vector<8x128xf32> to vector<8x128xbf16>
    %cst_37 = arith.constant dense<0.000000e+00> : vector<128x8xf32>
    %78 = tpu.matmul %76, %77, %cst_37 {dimension_numbers = #tpu.dot_dimension_numbers<[1], [1], [0], [0], [0, 0, 1, 0], [], []>} : vector<128x128xbf16>, vector<8x128xbf16>, vector<128x8xf32> -> vector<128x8xf32>
    %79 = tpu.reciprocal %75 {approx = true} : vector<128x1xf32> -> vector<128x1xf32>
    %80 = vector.broadcast %79 : vector<128x1xf32> to vector<128x8xf32>
    %81 = arith.mulf %78, %80 : vector<128x8xf32>
    %82 = arith.truncf %81 : vector<128x8xf32> to vector<128x8xbf16>
    %cst_38 = arith.constant dense<0.000000e+00> : vector<16x128xf32>
    %83 = tpu.matmul %6, %82, %cst_38 {dimension_numbers = #tpu.dot_dimension_numbers<[1], [1], [0], [0], [0, 0, 1, 0], [], []>} : vector<16x8xbf16>, vector<128x8xbf16>, vector<16x128xf32> -> vector<16x128xf32>
    %c0_39 = arith.constant 0 : index
    %c0_40 = arith.constant 0 : index
    %84 = vector.load %arg5[%c0_39, %c0_40] : memref<16x1xf32, #tpu.memory_space<vmem>>, vector<16x1xf32>
    %85 = vector.broadcast %84 : vector<16x1xf32> to vector<16x128xf32>
    %86 = arith.addf %83, %85 : vector<16x128xf32>
    %87 = arith.addf %86, %57 : vector<16x128xf32>
    %c2_i32_41 = arith.constant 2 : i32
    %88 = arith.muli %arg0, %c2_i32_41 : i32
    %c1_i32 = arith.constant 1 : i32
    %89 = arith.addi %88, %c1_i32 : i32
    %90 = arith.index_cast %89 : i32 to index
    %c0_42 = arith.constant 0 : index
    %c0_43 = arith.constant 0 : index
    %91 = vector.load %arg9[%90, %c0_42, %c0_43] : memref<2x16x128xf32, #tpu.memory_space<vmem>>, vector<1x16x128xf32>
    %92 = vector.shape_cast %91 : vector<1x16x128xf32> to vector<16x128xf32>
    %93 = vector.shape_cast %87 : vector<16x128xf32> to vector<1x16x128xf32>
    tpu.vector_store %arg9[%90, %c0_42, %c0_43], %93 {strides = array<i32>} : memref<2x16x128xf32, #tpu.memory_space<vmem>>, vector<1x16x128xf32>,
    %c0_44 = arith.constant 0 : index
    %c0_45 = arith.constant 0 : index
    %94 = vector.load %arg10[%c0_44, %c0_45] : memref<16x1xf32, #tpu.memory_space<vmem>>, vector<16x1xf32>
    %cst_46 = arith.constant dense<0.000000e+00> : vector<16xf32>
    %95 = vector.multi_reduction <add>, %87, %cst_46 [1] : vector<16x128xf32> to vector<16xf32>
    %96 = vector.shape_cast %95 : vector<16xf32> to vector<16x1xf32>
    %97 = arith.addf %94, %96 : vector<16x1xf32>
    %c0_47 = arith.constant 0 : index
    %c0_48 = arith.constant 0 : index
    %98 = vector.load %arg10[%c0_47, %c0_48] : memref<16x1xf32, #tpu.memory_space<vmem>>, vector<16x1xf32>
    tpu.vector_store %arg10[%c0_47, %c0_48], %97 {strides = array<i32>} : memref<16x1xf32, #tpu.memory_space<vmem>>, vector<16x1xf32>,
    %c0_49 = arith.constant 0 : index
    %c0_50 = arith.constant 0 : index
    %99 = vector.load %arg11[%c0_49, %c0_50] : memref<16x1xf32, #tpu.memory_space<vmem>>, vector<16x1xf32>
    %100 = arith.mulf %87, %87 : vector<16x128xf32>
    %cst_51 = arith.constant dense<0.000000e+00> : vector<16xf32>
    %101 = vector.multi_reduction <add>, %100, %cst_51 [1] : vector<16x128xf32> to vector<16xf32>
    %102 = vector.shape_cast %101 : vector<16xf32> to vector<16x1xf32>
    %103 = arith.addf %99, %102 : vector<16x1xf32>
    %c0_52 = arith.constant 0 : index
    %c0_53 = arith.constant 0 : index
    %104 = vector.load %arg11[%c0_52, %c0_53] : memref<16x1xf32, #tpu.memory_space<vmem>>, vector<16x1xf32>
    tpu.vector_store %arg11[%c0_52, %c0_53], %103 {strides = array<i32>} : memref<16x1xf32, #tpu.memory_space<vmem>>, vector<16x1xf32>,
    %c0_i32_54 = arith.constant 0 : i32
    %105 = arith.cmpi eq, %arg0, %c0_i32_54 : i32
    %106 = arith.extui %105 : i1 to i32
    %c0_i32_55 = arith.constant 0 : i32
    %107 = arith.cmpi ne, %106, %c0_i32_55 : i32
    scf.if %107 {
      %c0_56 = arith.constant 0 : index
      %c0_57 = arith.constant 0 : index
      %108 = vector.load %arg10[%c0_56, %c0_57] : memref<16x1xf32, #tpu.memory_space<vmem>>, vector<16x1xf32>
      %cst_58 = arith.constant 2.560000e+02 : f32
      %109 = vector.broadcast %cst_58 : f32 to vector<16x1xf32>
      %110 = arith.divf %108, %109 : vector<16x1xf32>
      %c0_59 = arith.constant 0 : index
      %c0_60 = arith.constant 0 : index
      %111 = vector.load %arg11[%c0_59, %c0_60] : memref<16x1xf32, #tpu.memory_space<vmem>>, vector<16x1xf32>
      %cst_61 = arith.constant 2.560000e+02 : f32
      %112 = vector.broadcast %cst_61 : f32 to vector<16x1xf32>
      %113 = arith.divf %111, %112 : vector<16x1xf32>
      %114 = arith.mulf %110, %110 : vector<16x1xf32>
      %115 = arith.subf %113, %114 : vector<16x1xf32>
      %cst_62 = arith.constant 0.000000e+00 : f32
      %116 = vector.broadcast %cst_62 : f32 to vector<16x1xf32>
      %117 = arith.maximumf %115, %116 : vector<16x1xf32>
      %cst_63 = arith.constant 9.99999974E-6 : f32
      %118 = vector.broadcast %cst_63 : f32 to vector<16x1xf32>
      %119 = arith.addf %117, %118 : vector<16x1xf32>
      %120 = math.rsqrt %119 : vector<16x1xf32>
      %c0_64 = arith.constant 0 : index
      %c0_65 = arith.constant 0 : index
      %121 = vector.load %arg6[%c0_64, %c0_65] : memref<16x1xf32, #tpu.memory_space<vmem>>, vector<16x1xf32>
      %122 = arith.mulf %121, %120 : vector<16x1xf32>
      %c0_66 = arith.constant 0 : index
      %c0_67 = arith.constant 0 : index
      %123 = vector.load %arg7[%c0_66, %c0_67] : memref<16x1xf32, #tpu.memory_space<vmem>>, vector<16x1xf32>
      %124 = arith.mulf %110, %122 : vector<16x1xf32>
      %125 = arith.subf %123, %124 : vector<16x1xf32>
      %c0_68 = arith.constant 0 : index
      %c0_69 = arith.constant 0 : index
      %c0_70 = arith.constant 0 : index
      %126 = vector.load %arg9[%c0_68, %c0_69, %c0_70] : memref<2x16x128xf32, #tpu.memory_space<vmem>>, vector<1x16x128xf32>
      %127 = vector.shape_cast %126 : vector<1x16x128xf32> to vector<16x128xf32>
      %128 = vector.broadcast %122 : vector<16x1xf32> to vector<16x128xf32>
      %129 = arith.mulf %127, %128 : vector<16x128xf32>
      %130 = vector.broadcast %125 : vector<16x1xf32> to vector<16x128xf32>
      %131 = arith.addf %129, %130 : vector<16x128xf32>
      %c0_71 = arith.constant 0 : index
      %c0_72 = arith.constant 0 : index
      %c0_73 = arith.constant 0 : index
      %132 = vector.load %arg8[%c0_71, %c0_72, %c0_73] : memref<2x16x128xf32, #tpu.memory_space<vmem>>, vector<1x16x128xf32>
      %133 = vector.shape_cast %132 : vector<1x16x128xf32> to vector<16x128xf32>
      %134 = vector.shape_cast %131 : vector<16x128xf32> to vector<1x16x128xf32>
      tpu.vector_store %arg8[%c0_71, %c0_72, %c0_73], %134 {strides = array<i32>} : memref<2x16x128xf32, #tpu.memory_space<vmem>>, vector<1x16x128xf32>,
      %c1_74 = arith.constant 1 : index
      %c0_75 = arith.constant 0 : index
      %c0_76 = arith.constant 0 : index
      %135 = vector.load %arg9[%c1_74, %c0_75, %c0_76] : memref<2x16x128xf32, #tpu.memory_space<vmem>>, vector<1x16x128xf32>
      %136 = vector.shape_cast %135 : vector<1x16x128xf32> to vector<16x128xf32>
      %137 = vector.broadcast %122 : vector<16x1xf32> to vector<16x128xf32>
      %138 = arith.mulf %136, %137 : vector<16x128xf32>
      %139 = vector.broadcast %125 : vector<16x1xf32> to vector<16x128xf32>
      %140 = arith.addf %138, %139 : vector<16x128xf32>
      %c1_77 = arith.constant 1 : index
      %c0_78 = arith.constant 0 : index
      %c0_79 = arith.constant 0 : index
      %141 = vector.load %arg8[%c1_77, %c0_78, %c0_79] : memref<2x16x128xf32, #tpu.memory_space<vmem>>, vector<1x16x128xf32>
      %142 = vector.shape_cast %141 : vector<1x16x128xf32> to vector<16x128xf32>
      %143 = vector.shape_cast %140 : vector<16x128xf32> to vector<1x16x128xf32>
      tpu.vector_store %arg8[%c1_77, %c0_78, %c0_79], %143 {strides = array<i32>} : memref<2x16x128xf32, #tpu.memory_space<vmem>>, vector<1x16x128xf32>,
    } else {
    }
    return
  }
  func.func @transform_0(%arg0: i32) -> (i32, i32, i32) {
    %c0_i32 = arith.constant 0 : i32
    %c0_i32_0 = arith.constant 0 : i32
    %c0_i32_1 = arith.constant 0 : i32
    return %arg0, %c0_i32, %c0_i32_0 : i32, i32, i32
  }
  func.func @transform_1(%arg0: i32) -> (i32, i32) {
    %c0_i32 = arith.constant 0 : i32
    %c0_i32_0 = arith.constant 0 : i32
    %c0_i32_1 = arith.constant 0 : i32
    return %c0_i32, %c0_i32_0 : i32, i32
  }
  func.func @transform_2(%arg0: i32) -> (i32, i32) {
    %c0_i32 = arith.constant 0 : i32
    %c0_i32_0 = arith.constant 0 : i32
    %c0_i32_1 = arith.constant 0 : i32
    return %c0_i32, %c0_i32_0 : i32, i32
  }
  func.func @transform_3(%arg0: i32) -> (i32, i32) {
    %c0_i32 = arith.constant 0 : i32
    %c0_i32_0 = arith.constant 0 : i32
    %c0_i32_1 = arith.constant 0 : i32
    return %c0_i32, %c0_i32_0 : i32, i32
  }
  func.func @transform_4(%arg0: i32) -> (i32, i32) {
    %c0_i32 = arith.constant 0 : i32
    %c0_i32_0 = arith.constant 0 : i32
    %c0_i32_1 = arith.constant 0 : i32
    return %c0_i32, %c0_i32_0 : i32, i32
  }
  func.func @transform_5(%arg0: i32) -> (i32, i32) {
    %c0_i32 = arith.constant 0 : i32
    %c0_i32_0 = arith.constant 0 : i32
    %c0_i32_1 = arith.constant 0 : i32
    return %c0_i32, %c0_i32_0 : i32, i32
  }
  func.func @transform_6(%arg0: i32) -> (i32, i32) {
    %c0_i32 = arith.constant 0 : i32
    %c0_i32_0 = arith.constant 0 : i32
    %c0_i32_1 = arith.constant 0 : i32
    return %c0_i32, %c0_i32_0 : i32, i32
  }
  func.func @transform_7(%arg0: i32) -> (i32, i32, i32) {
    %c0_i32 = arith.constant 0 : i32
    %c0_i32_0 = arith.constant 0 : i32
    %c0_i32_1 = arith.constant 0 : i32
    %c0_i32_2 = arith.constant 0 : i32
    return %c0_i32, %c0_i32_0, %c0_i32_1 : i32, i32, i32
  }
}

</mosaic_0001>

<llo_original>
// kernel: tpu_custom_call.1
$region0: #{tpu_custom_call.1}
  #allocation0 [shape = 'u32[]', space=smem, size = 0x4, offset = 0x4, fixed_abs, tag = 'smem constant byte address 0x4 - core index']
  #allocation1 [shape = 'u32[144,128]{1,0:T(1,128)}', space=vmem, size = 0x12000, scoped, tag = 'internal scratch']
  #allocation2 [shape = 'f32[2,16,128]{2,1,0:T(8,128)}', space=vmem, size = 0x4000, scoped, tag = 'scratch operand']
  #allocation3 [shape = 'f32[16,1]{1,0:T(8,128)}', space=vmem, size = 0x2000, scoped, tag = 'scratch operand']
  #allocation4 [shape = 'f32[16,1]{1,0:T(8,128)}', space=vmem, size = 0x2000, scoped, tag = 'scratch operand']
  %s0 = inlined_call_operand.vmem [shape: f32[2,16,128], index: 0, kind: input, shape index: {}]
  %s1 = inlined_call_operand.vmem [shape: f32[24,16], index: 1, kind: input, shape index: {}]
  %s2 = inlined_call_operand.vmem [shape: f32[24,1], index: 2, kind: input, shape index: {}]
  %s3 = inlined_call_operand.vmem [shape: f32[16,8], index: 3, kind: input, shape index: {}]
  %s4 = inlined_call_operand.vmem [shape: f32[16,1], index: 4, kind: input, shape index: {}]
  %s5 = inlined_call_operand.vmem [shape: f32[16,1], index: 5, kind: input, shape index: {}]
  %s6 = inlined_call_operand.vmem [shape: f32[16,1], index: 6, kind: input, shape index: {}]
  %s7 = inlined_call_operand.hbm [shape: f32[2,16,128], index: 7, kind: output, shape index: {}]
  %s8 = sld [smem:[#allocation0]]
  $region46: #{tpu_custom_call.1} parent=0
    _
  %s10 = ssub.s32 1, %s8
  %s11 = scalar_select 0, %s10, %s8
  $region1: #{tpu_custom_call.1} parent=0
    #allocation5 [shape = 'u8[16384]{0}', space=vmem, size = 0x4000, scoped, tag = 'output window, operand 0, single buffered']
    #allocation6 [shape = 's32[1]{0}', space=sflag, size = 0x4, scoped, tag = 'scoped memory for tpu_custom_call.1']
    %12 = vsyncpa [#allocation6], 0
    // Predicated region
    $region2: #{tpu_custom_call.1} parent=1 // pred_check
      _
    $region3: #{tpu_custom_call.1} parent=1 // pred_check_branch
      %14 = sbr.rel (0) target = $region5
    $region4: #{tpu_custom_call.1} parent=1 // pred_region
      _
    $region5: #{tpu_custom_call.1} parent=1 // pred_fallthru
      _
    // Predicated region
    $region6: #{tpu_custom_call.1} parent=1 // pred_check
      _
    $region7: #{tpu_custom_call.1} parent=1 // pred_check_branch
      %16 = sbr.rel (0) target = $region9
    $region8: #{tpu_custom_call.1} parent=1 // pred_region
      _
    $region9: #{tpu_custom_call.1} parent=1 // pred_fallthru
      _
    // Predicated region
    $region10: #{tpu_custom_call.1} parent=1 // pred_check
      _
    $region11: #{tpu_custom_call.1} parent=1 // pred_check_branch
      %18 = sbr.rel (0) target = $region13
    $region12: #{tpu_custom_call.1} parent=1 // pred_region
      _
    $region13: #{tpu_custom_call.1} parent=1 // pred_fallthru
      _
    // Predicated region
    $region14: #{tpu_custom_call.1} parent=1 // pred_check
      _
    $region15: #{tpu_custom_call.1} parent=1 // pred_check_branch
      %20 = sbr.rel (0) target = $region17
    $region16: #{tpu_custom_call.1} parent=1 // pred_region
      _
    $region17: #{tpu_custom_call.1} parent=1 // pred_fallthru
      _
    // Predicated region
    $region18: #{tpu_custom_call.1} parent=1 // pred_check
      _
    $region19: #{tpu_custom_call.1} parent=1 // pred_check_branch
      %22 = sbr.rel (0) target = $region21
    $region20: #{tpu_custom_call.1} parent=1 // pred_region
      _
    $region21: #{tpu_custom_call.1} parent=1 // pred_fallthru
      _
    // Predicated region
    $region22: #{tpu_custom_call.1} parent=1 // pred_check
      _
    $region23: #{tpu_custom_call.1} parent=1 // pred_check_branch
      %24 = sbr.rel (0) target = $region25
    $region24: #{tpu_custom_call.1} parent=1 // pred_region
      _
    $region25: #{tpu_custom_call.1} parent=1 // pred_fallthru
      _
    // Predicated region
    $region26: #{tpu_custom_call.1} parent=1 // pred_check
      _
    $region27: #{tpu_custom_call.1} parent=1 // pred_check_branch
      %26 = sbr.rel (0) target = $region29
    $region28: #{tpu_custom_call.1} parent=1 // pred_region
      _
    $region29: #{tpu_custom_call.1} parent=1 // pred_fallthru
      _
    %p28 = scmp.eq.s32.totalorder 0, 0
    // Predicated region
    $region30: #{tpu_custom_call.1} parent=1 // pred_check
      %p29 = pneg %p28
    $region31: #{tpu_custom_call.1} parent=1 // pred_check_branch
      %31 = sbr.rel (%p29) target = $region33
    $region32: #{tpu_custom_call.1} parent=1 // pred_region
      %vm32 = vcmask 7168
      %33 = vst.msk [vmem:[#allocation3] sm:$0xff] %vm32, 0.0
      %34 = vst.msk [vmem:[#allocation3 + $0x8] sm:$0xff] %vm32, 0.0
      %35 = vst.msk [vmem:[#allocation4] sm:$0xff] %vm32, 0.0
      %36 = vst.msk [vmem:[#allocation4 + $0x8] sm:$0xff] %vm32, 0.0
    $region33: #{tpu_custom_call.1} parent=1 // pred_fallthru
      _
    %v37 = vld [vmem:[%s1] sm:$0xff]
    %v38 = vld [vmem:[%s1 + $0x8] sm:$0xff]
    %v39 = vld [vmem:[%s1 + $0x10] sm:$0xff]
    %v40 = vpack.c.bf16 %v38, %v37
    %v41 = vpack.c.bf16 %v39, %v39
    %v42 = vld [vmem:[%s3] sm:$0xff]
    %v43 = vld [vmem:[%s3 + $0x8] sm:$0xff]
    %v44 = vpack.c.bf16 %v43, %v42
    %v45 = vld [vmem:[%s0] sm:$0xff]
    %v46 = vld [vmem:[%s0 + $0x8] sm:$0xff]
    %v47 = vpack.c.bf16 %v46, %v45
    %v48 = vld [vmem:[%s2] sm:$0xff]
    %v49 = vld [vmem:[%s2 + $0x8] sm:$0xff]
    %v50 = vld [vmem:[%s2 + $0x10] sm:$0xff]
    %52 = vset.pattern.permute.xlu0 0
    %53 = vperm.xlu0 %52, %v48
    %v54 = vpop.permute.xlu0 %53
    %57 = vset.pattern.permute.xlu0 0
    %58 = vperm.xlu0 %57, %v49
    %v59 = vpop.permute.xlu0 %58
    %62 = vset.pattern.permute.xlu0 0
    %63 = vperm.xlu0 %62, %v50
    %v64 = vpop.permute.xlu0 %63
    %vm66 = vcmask 130048
    %v68 = vsel %vm66, %v40, 0
    %v71 = vsel %vm66, %v41, 0
    %73 = vmatprep.subr.bf16.mxu0 0
    %74 = vmatpush1.bf16.msra.mxu0 0
    %75 = vmatprep.subr.bf16.mxu0 0
    %76 = vmatpush1.bf16.msra.mxu0 0
    %77 = vmatprep.subr.bf16.mxu0 0
    %78 = vmatpush1.bf16.msra.mxu0 0
    %79 = vmatprep.subr.bf16.mxu0 0
    %80 = vmatpush1.bf16.msra.mxu0 0
    %81 = vmatprep.subr.bf16.mxu0 0
    %82 = vmatpush1.bf16.msra.mxu0 0
    %83 = vmatprep.subr.bf16.mxu0 0
    %84 = vmatpush1.bf16.msra.mxu0 0
    %85 = vmatprep.subr.bf16.mxu0 0
    %86 = vmatpush1.bf16.msra.mxu0 0
    %87 = vmatprep.subr.bf16.mxu0 0
    %88 = vmatpush1.bf16.msra.mxu0 %v47
    %89 = vmatprep.subr.bf16.mxu0 0
    %90 = vmatpush2.bf16.msra.mxu0 0
    %91 = vmatprep.subr.bf16.mxu0 0
    %92 = vmatpush2.bf16.msra.mxu0 0
    %93 = vmatprep.subr.bf16.mxu0 0
    %94 = vmatpush2.bf16.msra.mxu0 0
    %95 = vmatprep.subr.bf16.mxu0 0
    %96 = vmatpush2.bf16.msra.mxu0 0
    %97 = vmatprep.subr.bf16.mxu0 0
    %98 = vmatpush2.bf16.msra.mxu0 0
    %99 = vmatprep.subr.bf16.mxu0 0
    %100 = vmatpush2.bf16.msra.mxu0 0
    %101 = vmatprep.subr.bf16.mxu0 0
    %102 = vmatpush2.bf16.msra.mxu0 0
    %103 = vmatprep.subr.bf16.mxu0 0
    %104 = vmatpush2.bf16.msra.mxu0 0
    %105 = vmatprep.mubr.bf16.mxu0 0
    %106 = vmatmul.mubr.bf16.gmra.mxu0 %v68
    %v107 = vpop.f32.mrf.mxu0
    %v108 = vadd.f32 %v54, %v107
    %v109 = vpop.f32.mrf.mxu0
    %v110 = vpop.f32.mrf.mxu0
    %v111 = vadd.f32 %v59, %v110
    %v112 = vpop.f32.mrf.mxu0
    %113 = vmatprep.mubr.bf16.mxu0 0
    %114 = vmatmul.mubr.bf16.gmra.mxu0 %v71
    %v115 = vpop.f32.mrf.mxu0
    %v116 = vadd.f32 %v64, %v115
    %v117 = vpop.f32.mrf.mxu0
    %v118 = vpop.f32.mrf.mxu0
    %v119 = vpop.f32.mrf.mxu0
    %120 = vdwg.mxu0
    %v121 = vpack.c.bf16 %v108, %v108
    %v122 = vpack.c.bf16 %v111, %v111
    %123 = vxpose.xlu0.c.b16.start [1/8] %v121, 128
    %124 = vxpose.xlu0.c.b16.cont [2/8] 0, 128
    %125 = vxpose.xlu0.c.b16.cont [3/8] 0, 128
    %126 = vxpose.xlu0.c.b16.cont [4/8] 0, 128
    %127 = vxpose.xlu0.c.b16.cont [5/8] 0, 128
    %128 = vxpose.xlu0.c.b16.cont [6/8] 0, 128
    %129 = vxpose.xlu0.c.b16.cont [7/8] 0, 128
    %130 = vxpose.xlu0.c.b16.end [8/8] 0, 128
    %v131 = vpop.trf.xlu0
    %v132 = vpop.trf.xlu0
    %v133 = vpop.trf.xlu0
    %v134 = vpop.trf.xlu0
    %v135 = vpop.trf.xlu0
    %v136 = vpop.trf.xlu0
    %v137 = vpop.trf.xlu0
    %v138 = vpop.trf.xlu0
    %vm139 = vcmask 64512
    %v141 = vsel %vm139, %v131, 0
    %v144 = vsel %vm139, %v132, 0
    %v147 = vsel %vm139, %v133, 0
    %v150 = vsel %vm139, %v134, 0
    %v153 = vsel %vm139, %v135, 0
    %v156 = vsel %vm139, %v136, 0
    %v159 = vsel %vm139, %v137, 0
    %v162 = vsel %vm139, %v138, 0
    %vm164 = vcmask 1043456
    %v166 = vsel %vm164, %v122, 0
    %168 = vmatprep.subr.bf16.mxu0 0
    %169 = vmatpush1.bf16.msra.mxu0 0
    %170 = vmatprep.subr.bf16.mxu0 0
    %171 = vmatpush1.bf16.msra.mxu0 0
    %172 = vmatprep.subr.bf16.mxu0 0
    %173 = vmatpush1.bf16.msra.mxu0 0
    %174 = vmatprep.subr.bf16.mxu0 0
    %175 = vmatpush1.bf16.msra.mxu0 0
    %176 = vmatprep.subr.bf16.mxu0 0
    %177 = vmatpush1.bf16.msra.mxu0 0
    %178 = vmatprep.subr.bf16.mxu0 0
    %179 = vmatpush1.bf16.msra.mxu0 0
    %180 = vmatprep.subr.bf16.mxu0 0
    %181 = vmatpush1.bf16.msra.mxu0 0
    %182 = vmatprep.subr.bf16.mxu0 0
    %183 = vmatpush1.bf16.msra.mxu0 %v166
    %184 = vmatprep.subr.bf16.mxu0 0
    %185 = vmatpush2.bf16.msra.mxu0 0
    %186 = vmatprep.subr.bf16.mxu0 0
    %187 = vmatpush2.bf16.msra.mxu0 0
    %188 = vmatprep.subr.bf16.mxu0 0
    %189 = vmatpush2.bf16.msra.mxu0 0
    %190 = vmatprep.subr.bf16.mxu0 0
    %191 = vmatpush2.bf16.msra.mxu0 0
    %192 = vmatprep.subr.bf16.mxu0 0
    %193 = vmatpush2.bf16.msra.mxu0 0
    %194 = vmatprep.subr.bf16.mxu0 0
    %195 = vmatpush2.bf16.msra.mxu0 0
    %196 = vmatprep.subr.bf16.mxu0 0
    %197 = vmatpush2.bf16.msra.mxu0 0
    %198 = vmatprep.subr.bf16.mxu0 0
    %199 = vmatpush2.bf16.msra.mxu0 0
    %200 = vmatprep.mubr.bf16.mxu0 0
    %201 = vmatmul.mubr.bf16.gmra.mxu0 %v141
    %v202 = vpop.f32.mrf.mxu0
    %v203 = vadd.f32 0.0, %v202
    %v204 = vpop.f32.mrf.mxu0
    %v205 = vpop.f32.mrf.mxu0
    %v206 = vadd.f32 0.0, %v205
    %v207 = vpop.f32.mrf.mxu0
    %208 = vmatprep.mubr.bf16.mxu0 0
    %209 = vmatmul.mubr.bf16.gmra.mxu0 %v144
    %v210 = vpop.f32.mrf.mxu0
    %v211 = vadd.f32 0.0, %v210
    %v212 = vpop.f32.mrf.mxu0
    %v213 = vpop.f32.mrf.mxu0
    %v214 = vadd.f32 0.0, %v213
    %v215 = vpop.f32.mrf.mxu0
    %216 = vmatprep.mubr.bf16.mxu0 0
    %217 = vmatmul.mubr.bf16.gmra.mxu0 %v147
    %v218 = vpop.f32.mrf.mxu0
    %v219 = vadd.f32 0.0, %v218
    %v220 = vpop.f32.mrf.mxu0
    %v221 = vpop.f32.mrf.mxu0
    %v222 = vadd.f32 0.0, %v221
    %v223 = vpop.f32.mrf.mxu0
    %224 = vmatprep.mubr.bf16.mxu0 0
    %225 = vmatmul.mubr.bf16.gmra.mxu0 %v150
    %v226 = vpop.f32.mrf.mxu0
    %v227 = vadd.f32 0.0, %v226
    %v228 = vpop.f32.mrf.mxu0
    %v229 = vpop.f32.mrf.mxu0
    %v230 = vadd.f32 0.0, %v229
    %v231 = vpop.f32.mrf.mxu0
    %232 = vmatprep.mubr.bf16.mxu0 0
    %233 = vmatmul.mubr.bf16.gmra.mxu0 %v153
    %v234 = vpop.f32.mrf.mxu0
    %v235 = vadd.f32 0.0, %v234
    %v236 = vpop.f32.mrf.mxu0
    %v237 = vpop.f32.mrf.mxu0
    %v238 = vadd.f32 0.0, %v237
    %v239 = vpop.f32.mrf.mxu0
    %240 = vmatprep.mubr.bf16.mxu0 0
    %241 = vmatmul.mubr.bf16.gmra.mxu0 %v156
    %v242 = vpop.f32.mrf.mxu0
    %v243 = vadd.f32 0.0, %v242
    %v244 = vpop.f32.mrf.mxu0
    %v245 = vpop.f32.mrf.mxu0
    %v246 = vadd.f32 0.0, %v245
    %v247 = vpop.f32.mrf.mxu0
    %248 = vmatprep.mubr.bf16.mxu0 0
    %249 = vmatmul.mubr.bf16.gmra.mxu0 %v159
    %v250 = vpop.f32.mrf.mxu0
    %v251 = vadd.f32 0.0, %v250
    %v252 = vpop.f32.mrf.mxu0
    %v253 = vpop.f32.mrf.mxu0
    %v254 = vadd.f32 0.0, %v253
    %v255 = vpop.f32.mrf.mxu0
    %256 = vmatprep.mubr.bf16.mxu0 0
    %257 = vmatmul.mubr.bf16.gmra.mxu0 %v162
    %v258 = vpop.f32.mrf.mxu0
    %v259 = vadd.f32 0.0, %v258
    %v260 = vpop.f32.mrf.mxu0
    %v261 = vpop.f32.mrf.mxu0
    %v262 = vadd.f32 0.0, %v261
    %v263 = vpop.f32.mrf.mxu0
    %264 = vdwg.mxu0
    %265 = vmax.xlane.f32.xlu0 %v203
    %v266 = vpop.xlane.xlu0 %265
    %267 = vmax.xlane.f32.xlu0 %v206
    %v268 = vpop.xlane.xlu0 %267
    %269 = vmax.xlane.f32.xlu0 %v211
    %v270 = vpop.xlane.xlu0 %269
    %271 = vmax.xlane.f32.xlu0 %v214
    %v272 = vpop.xlane.xlu0 %271
    %273 = vmax.xlane.f32.xlu0 %v219
    %v274 = vpop.xlane.xlu0 %273
    %275 = vmax.xlane.f32.xlu0 %v222
    %v276 = vpop.xlane.xlu0 %275
    %277 = vmax.xlane.f32.xlu0 %v227
    %v278 = vpop.xlane.xlu0 %277
    %279 = vmax.xlane.f32.xlu0 %v230
    %v280 = vpop.xlane.xlu0 %279
    %281 = vmax.xlane.f32.xlu0 %v235
    %v282 = vpop.xlane.xlu0 %281
    %283 = vmax.xlane.f32.xlu0 %v238
    %v284 = vpop.xlane.xlu0 %283
    %285 = vmax.xlane.f32.xlu0 %v243
    %v286 = vpop.xlane.xlu0 %285
    %287 = vmax.xlane.f32.xlu0 %v246
    %v288 = vpop.xlane.xlu0 %287
    %289 = vmax.xlane.f32.xlu0 %v251
    %v290 = vpop.xlane.xlu0 %289
    %291 = vmax.xlane.f32.xlu0 %v254
    %v292 = vpop.xlane.xlu0 %291
    %293 = vmax.xlane.f32.xlu0 %v259
    %v294 = vpop.xlane.xlu0 %293
    %295 = vmax.xlane.f32.xlu0 %v262
    %v296 = vpop.xlane.xlu0 %295
    %v297 = vsub.f32 %v203, %v266
    %v298 = vsub.f32 %v206, %v268
    %v299 = vsub.f32 %v211, %v270
    %v300 = vsub.f32 %v214, %v272
    %v301 = vsub.f32 %v219, %v274
    %v302 = vsub.f32 %v222, %v276
    %v303 = vsub.f32 %v227, %v278
    %v304 = vsub.f32 %v230, %v280
    %v305 = vsub.f32 %v235, %v282
    %v306 = vsub.f32 %v238, %v284
    %v307 = vsub.f32 %v243, %v286
    %v308 = vsub.f32 %v246, %v288
    %v309 = vsub.f32 %v251, %v290
    %v310 = vsub.f32 %v254, %v292
    %v311 = vsub.f32 %v259, %v294
    %v312 = vsub.f32 %v262, %v296
    %v313 = vmul.f32 %v297, 1.442695
    %v314 = vpow.pop %v313
    %v315 = vmul.f32 %v298, 1.442695
    %v316 = vpow.pop %v315
    %v317 = vmul.f32 %v299, 1.442695
    %v318 = vpow.pop %v317
    %v319 = vmul.f32 %v300, 1.442695
    %v320 = vpow.pop %v319
    %v321 = vmul.f32 %v301, 1.442695
    %v322 = vpow.pop %v321
    %v323 = vmul.f32 %v302, 1.442695
    %v324 = vpow.pop %v323
    %v325 = vmul.f32 %v303, 1.442695
    %v326 = vpow.pop %v325
    %v327 = vmul.f32 %v304, 1.442695
    %v328 = vpow.pop %v327
    %v329 = vmul.f32 %v305, 1.442695
    %v330 = vpow.pop %v329
    %v331 = vmul.f32 %v306, 1.442695
    %v332 = vpow.pop %v331
    %v333 = vmul.f32 %v307, 1.442695
    %v334 = vpow.pop %v333
    %v335 = vmul.f32 %v308, 1.442695
    %v336 = vpow.pop %v335
    %v337 = vmul.f32 %v309, 1.442695
    %v338 = vpow.pop %v337
    %v339 = vmul.f32 %v310, 1.442695
    %v340 = vpow.pop %v339
    %v341 = vmul.f32 %v311, 1.442695
    %v342 = vpow.pop %v341
    %v343 = vmul.f32 %v312, 1.442695
    %v344 = vpow.pop %v343
    %345 = vadd.xlane.f32.xlu0 %v314
    %v346 = vpop.xlane.xlu0 %345
    %347 = vadd.xlane.f32.xlu0 %v316
    %v348 = vpop.xlane.xlu0 %347
    %349 = vadd.xlane.f32.xlu0 %v318
    %v350 = vpop.xlane.xlu0 %349
    %351 = vadd.xlane.f32.xlu0 %v320
    %v352 = vpop.xlane.xlu0 %351
    %353 = vadd.xlane.f32.xlu0 %v322
    %v354 = vpop.xlane.xlu0 %353
    %355 = vadd.xlane.f32.xlu0 %v324
    %v356 = vpop.xlane.xlu0 %355
    %357 = vadd.xlane.f32.xlu0 %v326
    %v358 = vpop.xlane.xlu0 %357
    %359 = vadd.xlane.f32.xlu0 %v328
    %v360 = vpop.xlane.xlu0 %359
    %361 = vadd.xlane.f32.xlu0 %v330
    %v362 = vpop.xlane.xlu0 %361
    %363 = vadd.xlane.f32.xlu0 %v332
    %v364 = vpop.xlane.xlu0 %363
    %365 = vadd.xlane.f32.xlu0 %v334
    %v366 = vpop.xlane.xlu0 %365
    %367 = vadd.xlane.f32.xlu0 %v336
    %v368 = vpop.xlane.xlu0 %367
    %369 = vadd.xlane.f32.xlu0 %v338
    %v370 = vpop.xlane.xlu0 %369
    %371 = vadd.xlane.f32.xlu0 %v340
    %v372 = vpop.xlane.xlu0 %371
    %373 = vadd.xlane.f32.xlu0 %v342
    %v374 = vpop.xlane.xlu0 %373
    %375 = vadd.xlane.f32.xlu0 %v344
    %v376 = vpop.xlane.xlu0 %375
    %v377 = vpack.c.bf16 %v316, %v314
    %v378 = vpack.c.bf16 %v320, %v318
    %v379 = vpack.c.bf16 %v324, %v322
    %v380 = vpack.c.bf16 %v328, %v326
    %v381 = vpack.c.bf16 %v332, %v330
    %v382 = vpack.c.bf16 %v336, %v334
    %v383 = vpack.c.bf16 %v340, %v338
    %v384 = vpack.c.bf16 %v344, %v342
    %v385 = vpack.c.bf16 %v116, %v116
    %386 = vmatprep.subr.bf16.mxu0 0
    %387 = vmatpush1.bf16.xpose.msra.mxu0 0
    %388 = vmatprep.subr.bf16.mxu0 0
    %389 = vmatpush1.bf16.xpose.msra.mxu0 0
    %390 = vmatprep.subr.bf16.mxu0 0
    %391 = vmatpush1.bf16.xpose.msra.mxu0 0
    %392 = vmatprep.subr.bf16.mxu0 0
    %393 = vmatpush1.bf16.xpose.msra.mxu0 0
    %394 = vmatprep.subr.bf16.mxu0 0
    %395 = vmatpush1.bf16.xpose.msra.mxu0 0
    %396 = vmatprep.subr.bf16.mxu0 0
    %397 = vmatpush1.bf16.xpose.msra.mxu0 0
    %398 = vmatprep.subr.bf16.mxu0 0
    %399 = vmatpush1.bf16.xpose.msra.mxu0 0
    %400 = vmatprep.subr.bf16.mxu0 0
    %401 = vmatpush1.bf16.xpose.msra.mxu0 %v385
    %402 = vmatprep.subr.bf16.mxu0 0
    %403 = vmatpush2.bf16.xpose.msra.mxu0 0
    %404 = vmatprep.subr.bf16.mxu0 0
    %405 = vmatpush2.bf16.xpose.msra.mxu0 0
    %406 = vmatprep.subr.bf16.mxu0 0
    %407 = vmatpush2.bf16.xpose.msra.mxu0 0
    %408 = vmatprep.subr.bf16.mxu0 0
    %409 = vmatpush2.bf16.xpose.msra.mxu0 0
    %410 = vmatprep.subr.bf16.mxu0 0
    %411 = vmatpush2.bf16.xpose.msra.mxu0 0
    %412 = vmatprep.subr.bf16.mxu0 0
    %413 = vmatpush2.bf16.xpose.msra.mxu0 0
    %414 = vmatprep.subr.bf16.mxu0 0
    %415 = vmatpush2.bf16.xpose.msra.mxu0 0
    %416 = vmatprep.subr.bf16.mxu0 0
    %417 = vmatpush2.bf16.xpose.msra.mxu0 0
    %418 = vmatprep.mubr.bf16.mxu0 0
    %419 = vmatmul.mubr.bf16.gmra.mxu0 %v377
    %v420 = vpop.f32.mrf.mxu0
    %v421 = vadd.f32 0.0, %v420
    %v422 = vpop.f32.mrf.mxu0
    %v423 = vpop.f32.mrf.mxu0
    %v424 = vadd.f32 0.0, %v423
    %v425 = vpop.f32.mrf.mxu0
    %426 = vmatprep.mubr.bf16.mxu0 0
    %427 = vmatmul.mubr.bf16.gmra.mxu0 %v378
    %v428 = vpop.f32.mrf.mxu0
    %v429 = vadd.f32 0.0, %v428
    %v430 = vpop.f32.mrf.mxu0
    %v431 = vpop.f32.mrf.mxu0
    %v432 = vadd.f32 0.0, %v431
    %v433 = vpop.f32.mrf.mxu0
    %434 = vmatprep.mubr.bf16.mxu0 0
    %435 = vmatmul.mubr.bf16.gmra.mxu0 %v379
    %v436 = vpop.f32.mrf.mxu0
    %v437 = vadd.f32 0.0, %v436
    %v438 = vpop.f32.mrf.mxu0
    %v439 = vpop.f32.mrf.mxu0
    %v440 = vadd.f32 0.0, %v439
    %v441 = vpop.f32.mrf.mxu0
    %442 = vmatprep.mubr.bf16.mxu0 0
    %443 = vmatmul.mubr.bf16.gmra.mxu0 %v380
    %v444 = vpop.f32.mrf.mxu0
    %v445 = vadd.f32 0.0, %v444
    %v446 = vpop.f32.mrf.mxu0
    %v447 = vpop.f32.mrf.mxu0
    %v448 = vadd.f32 0.0, %v447
    %v449 = vpop.f32.mrf.mxu0
    %450 = vmatprep.mubr.bf16.mxu0 0
    %451 = vmatmul.mubr.bf16.gmra.mxu0 %v381
    %v452 = vpop.f32.mrf.mxu0
    %v453 = vadd.f32 0.0, %v452
    %v454 = vpop.f32.mrf.mxu0
    %v455 = vpop.f32.mrf.mxu0
    %v456 = vadd.f32 0.0, %v455
    %v457 = vpop.f32.mrf.mxu0
    %458 = vmatprep.mubr.bf16.mxu0 0
    %459 = vmatmul.mubr.bf16.gmra.mxu0 %v382
    %v460 = vpop.f32.mrf.mxu0
    %v461 = vadd.f32 0.0, %v460
    %v462 = vpop.f32.mrf.mxu0
    %v463 = vpop.f32.mrf.mxu0
    %v464 = vadd.f32 0.0, %v463
    %v465 = vpop.f32.mrf.mxu0
    %466 = vmatprep.mubr.bf16.mxu0 0
    %467 = vmatmul.mubr.bf16.gmra.mxu0 %v383
    %v468 = vpop.f32.mrf.mxu0
    %v469 = vadd.f32 0.0, %v468
    %v470 = vpop.f32.mrf.mxu0
    %v471 = vpop.f32.mrf.mxu0
    %v472 = vadd.f32 0.0, %v471
    %v473 = vpop.f32.mrf.mxu0
    %474 = vmatprep.mubr.bf16.mxu0 0
    %475 = vmatmul.mubr.bf16.gmra.mxu0 %v384
    %v476 = vpop.f32.mrf.mxu0
    %v477 = vadd.f32 0.0, %v476
    %v478 = vpop.f32.mrf.mxu0
    %v479 = vpop.f32.mrf.mxu0
    %v480 = vadd.f32 0.0, %v479
    %v481 = vpop.f32.mrf.mxu0
    %482 = vdwg.mxu0
    %v483 = vrcp.pop %v346
    %v484 = vrcp.pop %v348
    %v485 = vrcp.pop %v350
    %v486 = vrcp.pop %v352
    %v487 = vrcp.pop %v354
    %v488 = vrcp.pop %v356
    %v489 = vrcp.pop %v358
    %v490 = vrcp.pop %v360
    %v491 = vrcp.pop %v362
    %v492 = vrcp.pop %v364
    %v493 = vrcp.pop %v366
    %v494 = vrcp.pop %v368
    %v495 = vrcp.pop %v370
    %v496 = vrcp.pop %v372
    %v497 = vrcp.pop %v374
    %v498 = vrcp.pop %v376
    %v499 = vmul.f32 %v421, %v483
    %v500 = vmul.f32 %v424, %v484
    %v501 = vmul.f32 %v429, %v485
    %v502 = vmul.f32 %v432, %v486
    %v503 = vmul.f32 %v437, %v487
    %v504 = vmul.f32 %v440, %v488
    %v505 = vmul.f32 %v445, %v489
    %v506 = vmul.f32 %v448, %v490
    %v507 = vmul.f32 %v453, %v491
    %v508 = vmul.f32 %v456, %v492
    %v509 = vmul.f32 %v461, %v493
    %v510 = vmul.f32 %v464, %v494
    %v511 = vmul.f32 %v469, %v495
    %v512 = vmul.f32 %v472, %v496
    %v513 = vmul.f32 %v477, %v497
    %v514 = vmul.f32 %v480, %v498
    %v515 = vpack.c.bf16 %v500, %v499
    %v516 = vpack.c.bf16 %v502, %v501
    %v517 = vpack.c.bf16 %v504, %v503
    %v518 = vpack.c.bf16 %v506, %v505
    %v519 = vpack.c.bf16 %v508, %v507
    %v520 = vpack.c.bf16 %v510, %v509
    %v521 = vpack.c.bf16 %v512, %v511
    %v522 = vpack.c.bf16 %v514, %v513
    %v523 = vld [vmem:[%s4] sm:$0xff]
    %v524 = vld [vmem:[%s4 + $0x8] sm:$0xff]
    %526 = vset.pattern.permute.xlu0 0
    %527 = vperm.xlu0 %526, %v523
    %v528 = vpop.permute.xlu0 %527
    %531 = vset.pattern.permute.xlu0 0
    %532 = vperm.xlu0 %531, %v524
    %v533 = vpop.permute.xlu0 %532
    %v536 = vsel %vm139, %v44, 0
    %v539 = vsel %vm139, %v515, 0
    %v542 = vsel %vm139, %v516, 0
    %v545 = vsel %vm139, %v517, 0
    %v548 = vsel %vm139, %v518, 0
    %v551 = vsel %vm139, %v519, 0
    %v554 = vsel %vm139, %v520, 0
    %v557 = vsel %vm139, %v521, 0
    %v560 = vsel %vm139, %v522, 0
    %562 = vmatprep.subr.bf16.mxu0 0
    %563 = vmatpush1.bf16.xpose.msra.mxu0 %v560
    %564 = vmatprep.subr.bf16.mxu0 0
    %565 = vmatpush1.bf16.xpose.msra.mxu0 %v557
    %566 = vmatprep.subr.bf16.mxu0 0
    %567 = vmatpush1.bf16.xpose.msra.mxu0 %v554
    %568 = vmatprep.subr.bf16.mxu0 0
    %569 = vmatpush1.bf16.xpose.msra.mxu0 %v551
    %570 = vmatprep.subr.bf16.mxu0 0
    %571 = vmatpush1.bf16.xpose.msra.mxu0 %v548
    %572 = vmatprep.subr.bf16.mxu0 0
    %573 = vmatpush1.bf16.xpose.msra.mxu0 %v545
    %574 = vmatprep.subr.bf16.mxu0 0
    %575 = vmatpush1.bf16.xpose.msra.mxu0 %v542
    %576 = vmatprep.subr.bf16.mxu0 0
    %577 = vmatpush1.bf16.xpose.msra.mxu0 %v539
    %578 = vmatprep.subr.bf16.mxu0 0
    %579 = vmatpush2.bf16.xpose.msra.mxu0 0
    %580 = vmatprep.subr.bf16.mxu0 0
    %581 = vmatpush2.bf16.xpose.msra.mxu0 0
    %582 = vmatprep.subr.bf16.mxu0 0
    %583 = vmatpush2.bf16.xpose.msra.mxu0 0
    %584 = vmatprep.subr.bf16.mxu0 0
    %585 = vmatpush2.bf16.xpose.msra.mxu0 0
    %586 = vmatprep.subr.bf16.mxu0 0
    %587 = vmatpush2.bf16.xpose.msra.mxu0 0
    %588 = vmatprep.subr.bf16.mxu0 0
    %589 = vmatpush2.bf16.xpose.msra.mxu0 0
    %590 = vmatprep.subr.bf16.mxu0 0
    %591 = vmatpush2.bf16.xpose.msra.mxu0 0
    %592 = vmatprep.subr.bf16.mxu0 0
    %593 = vmatpush2.bf16.xpose.msra.mxu0 0
    %594 = vmatprep.mubr.bf16.mxu0 0
    %595 = vmatmul.mubr.bf16.gmra.mxu0 %v536
    %v596 = vpop.f32.mrf.mxu0
    %v597 = vadd.f32 %v528, %v596
    %v598 = vpop.f32.mrf.mxu0
    %v599 = vpop.f32.mrf.mxu0
    %v600 = vadd.f32 %v533, %v599
    %v601 = vpop.f32.mrf.mxu0
    %602 = vdwg.mxu0
    %v603 = vadd.f32 %v597, %v45
    %v604 = vadd.f32 %v600, %v46
    %s605 = smul.u32 0, 2
    %s606 = smul.u32 %s605, 16
    %s607 = scalar_lea.vmem [#allocation2], %s606
    %608 = vst [vmem:[%s607] sm:$0xff] %v603
    %609 = vst [vmem:[%s607 + $0x8] sm:$0xff] %v604
    %v610 = vld [vmem:[#allocation3] sm:$0xff]
    %v611 = vld [vmem:[#allocation3 + $0x8] sm:$0xff]
    %612 = vadd.xlane.f32.xlu0 %v603
    %v613 = vpop.xlane.xlu0 %612
    %614 = vadd.xlane.f32.xlu0 %v604
    %v615 = vpop.xlane.xlu0 %614
    %v616 = vadd.f32 %v610, %v613
    %v617 = vadd.f32 %v611, %v615
    %vm618 = vcmask 7168
    %619 = vst.msk [vmem:[#allocation3] sm:$0xff] %vm618, %v616
    %620 = vst.msk [vmem:[#allocation3 + $0x8] sm:$0xff] %vm618, %v617
    %v621 = vld [vmem:[#allocation4] sm:$0xff]
    %v622 = vld [vmem:[#allocation4 + $0x8] sm:$0xff]
    %v623 = vmul.f32 %v603, %v603
    %v624 = vmul.f32 %v604, %v604
    %625 = vadd.xlane.f32.xlu0 %v623
    %v626 = vpop.xlane.xlu0 %625
    %627 = vadd.xlane.f32.xlu0 %v624
    %v628 = vpop.xlane.xlu0 %627
    %v629 = vadd.f32 %v621, %v626
    %v630 = vadd.f32 %v622, %v628
    %631 = vst.msk [vmem:[#allocation4] sm:$0xff] %vm618, %v629
    %632 = vst.msk [vmem:[#allocation4 + $0x8] sm:$0xff] %vm618, %v630
    %s633 = scalar_lea.vmem %s0, 16
    %v634 = vld [vmem:[%s633] sm:$0xff]
    %v635 = vld [vmem:[%s633 + $0x8] sm:$0xff]
    %v636 = vpack.c.bf16 %v635, %v634
    %v637 = vld [vmem:[%s2] sm:$0xff]
    %v638 = vld [vmem:[%s2 + $0x8] sm:$0xff]
    %v639 = vld [vmem:[%s2 + $0x10] sm:$0xff]
    %641 = vset.pattern.permute.xlu0 0
    %642 = vperm.xlu0 %641, %v637
    %v643 = vpop.permute.xlu0 %642
    %646 = vset.pattern.permute.xlu0 0
    %647 = vperm.xlu0 %646, %v638
    %v648 = vpop.permute.xlu0 %647
    %651 = vset.pattern.permute.xlu0 0
    %652 = vperm.xlu0 %651, %v639
    %v653 = vpop.permute.xlu0 %652
    %655 = vmatprep.subr.bf16.mxu0 0
    %656 = vmatpush1.bf16.msra.mxu0 0
    %657 = vmatprep.subr.bf16.mxu0 0
    %658 = vmatpush1.bf16.msra.mxu0 0
    %659 = vmatprep.subr.bf16.mxu0 0
    %660 = vmatpush1.bf16.msra.mxu0 0
    %661 = vmatprep.subr.bf16.mxu0 0
    %662 = vmatpush1.bf16.msra.mxu0 0
    %663 = vmatprep.subr.bf16.mxu0 0
    %664 = vmatpush1.bf16.msra.mxu0 0
    %665 = vmatprep.subr.bf16.mxu0 0
    %666 = vmatpush1.bf16.msra.mxu0 0
    %667 = vmatprep.subr.bf16.mxu0 0
    %668 = vmatpush1.bf16.msra.mxu0 0
    %669 = vmatprep.subr.bf16.mxu0 0
    %670 = vmatpush1.bf16.msra.mxu0 %v636
    %671 = vmatprep.subr.bf16.mxu0 0
    %672 = vmatpush2.bf16.msra.mxu0 0
    %673 = vmatprep.subr.bf16.mxu0 0
    %674 = vmatpush2.bf16.msra.mxu0 0
    %675 = vmatprep.subr.bf16.mxu0 0
    %676 = vmatpush2.bf16.msra.mxu0 0
    %677 = vmatprep.subr.bf16.mxu0 0
    %678 = vmatpush2.bf16.msra.mxu0 0
    %679 = vmatprep.subr.bf16.mxu0 0
    %680 = vmatpush2.bf16.msra.mxu0 0
    %681 = vmatprep.subr.bf16.mxu0 0
    %682 = vmatpush2.bf16.msra.mxu0 0
    %683 = vmatprep.subr.bf16.mxu0 0
    %684 = vmatpush2.bf16.msra.mxu0 0
    %685 = vmatprep.subr.bf16.mxu0 0
    %686 = vmatpush2.bf16.msra.mxu0 0
    %687 = vmatprep.mubr.bf16.mxu0 0
    %688 = vmatmul.mubr.bf16.gmra.mxu0 %v68
    %v689 = vpop.f32.mrf.mxu0
    %v690 = vadd.f32 %v643, %v689
    %v691 = vpop.f32.mrf.mxu0
    %v692 = vpop.f32.mrf.mxu0
    %v693 = vadd.f32 %v648, %v692
    %v694 = vpop.f32.mrf.mxu0
    %695 = vmatprep.mubr.bf16.mxu0 0
    %696 = vmatmul.mubr.bf16.gmra.mxu0 %v71
    %v697 = vpop.f32.mrf.mxu0
    %v698 = vadd.f32 %v653, %v697
    %v699 = vpop.f32.mrf.mxu0
    %v700 = vpop.f32.mrf.mxu0
    %v701 = vpop.f32.mrf.mxu0
    %702 = vdwg.mxu0
    %v703 = vpack.c.bf16 %v690, %v690
    %v704 = vpack.c.bf16 %v693, %v693
    %705 = vxpose.xlu0.c.b16.start [1/8] %v703, 128
    %706 = vxpose.xlu0.c.b16.cont [2/8] 0, 128
    %707 = vxpose.xlu0.c.b16.cont [3/8] 0, 128
    %708 = vxpose.xlu0.c.b16.cont [4/8] 0, 128
    %709 = vxpose.xlu0.c.b16.cont [5/8] 0, 128
    %710 = vxpose.xlu0.c.b16.cont [6/8] 0, 128
    %711 = vxpose.xlu0.c.b16.cont [7/8] 0, 128
    %712 = vxpose.xlu0.c.b16.end [8/8] 0, 128
    %v713 = vpop.trf.xlu0
    %v714 = vpop.trf.xlu0
    %v715 = vpop.trf.xlu0
    %v716 = vpop.trf.xlu0
    %v717 = vpop.trf.xlu0
    %v718 = vpop.trf.xlu0
    %v719 = vpop.trf.xlu0
    %v720 = vpop.trf.xlu0
    %v722 = vsel %vm139, %v713, 0
    %v725 = vsel %vm139, %v714, 0
    %v728 = vsel %vm139, %v715, 0
    %v731 = vsel %vm139, %v716, 0
    %v734 = vsel %vm139, %v717, 0
    %v737 = vsel %vm139, %v718, 0
    %v740 = vsel %vm139, %v719, 0
    %v743 = vsel %vm139, %v720, 0
    %v746 = vsel %vm164, %v704, 0
    %748 = vmatprep.subr.bf16.mxu0 0
    %749 = vmatpush1.bf16.msra.mxu0 0
    %750 = vmatprep.subr.bf16.mxu0 0
    %751 = vmatpush1.bf16.msra.mxu0 0
    %752 = vmatprep.subr.bf16.mxu0 0
    %753 = vmatpush1.bf16.msra.mxu0 0
    %754 = vmatprep.subr.bf16.mxu0 0
    %755 = vmatpush1.bf16.msra.mxu0 0
    %756 = vmatprep.subr.bf16.mxu0 0
    %757 = vmatpush1.bf16.msra.mxu0 0
    %758 = vmatprep.subr.bf16.mxu0 0
    %759 = vmatpush1.bf16.msra.mxu0 0
    %760 = vmatprep.subr.bf16.mxu0 0
    %761 = vmatpush1.bf16.msra.mxu0 0
    %762 = vmatprep.subr.bf16.mxu0 0
    %763 = vmatpush1.bf16.msra.mxu0 %v746
    %764 = vmatprep.subr.bf16.mxu0 0
    %765 = vmatpush2.bf16.msra.mxu0 0
    %766 = vmatprep.subr.bf16.mxu0 0
    %767 = vmatpush2.bf16.msra.mxu0 0
    %768 = vmatprep.subr.bf16.mxu0 0
    %769 = vmatpush2.bf16.msra.mxu0 0
    %770 = vmatprep.subr.bf16.mxu0 0
    %771 = vmatpush2.bf16.msra.mxu0 0
    %772 = vmatprep.subr.bf16.mxu0 0
    %773 = vmatpush2.bf16.msra.mxu0 0
    %774 = vmatprep.subr.bf16.mxu0 0
    %775 = vmatpush2.bf16.msra.mxu0 0
    %776 = vmatprep.subr.bf16.mxu0 0
    %777 = vmatpush2.bf16.msra.mxu0 0
    %778 = vmatprep.subr.bf16.mxu0 0
    %779 = vmatpush2.bf16.msra.mxu0 0
    %780 = vmatprep.mubr.bf16.mxu0 0
    %781 = vmatmul.mubr.bf16.gmra.mxu0 %v722
    %v782 = vpop.f32.mrf.mxu0
    %v783 = vadd.f32 0.0, %v782
    %v784 = vpop.f32.mrf.mxu0
    %v785 = vpop.f32.mrf.mxu0
    %v786 = vadd.f32 0.0, %v785
    %v787 = vpop.f32.mrf.mxu0
    %788 = vmatprep.mubr.bf16.mxu0 0
    %789 = vmatmul.mubr.bf16.gmra.mxu0 %v725
    %v790 = vpop.f32.mrf.mxu0
    %v791 = vadd.f32 0.0, %v790
    %v792 = vpop.f32.mrf.mxu0
    %v793 = vpop.f32.mrf.mxu0
    %v794 = vadd.f32 0.0, %v793
    %v795 = vpop.f32.mrf.mxu0
    %796 = vmatprep.mubr.bf16.mxu0 0
    %797 = vmatmul.mubr.bf16.gmra.mxu0 %v728
    %v798 = vpop.f32.mrf.mxu0
    %v799 = vadd.f32 0.0, %v798
    %v800 = vpop.f32.mrf.mxu0
    %v801 = vpop.f32.mrf.mxu0
    %v802 = vadd.f32 0.0, %v801
    %v803 = vpop.f32.mrf.mxu0
    %804 = vmatprep.mubr.bf16.mxu0 0
    %805 = vmatmul.mubr.bf16.gmra.mxu0 %v731
    %v806 = vpop.f32.mrf.mxu0
    %v807 = vadd.f32 0.0, %v806
    %v808 = vpop.f32.mrf.mxu0
    %v809 = vpop.f32.mrf.mxu0
    %v810 = vadd.f32 0.0, %v809
    %v811 = vpop.f32.mrf.mxu0
    %812 = vmatprep.mubr.bf16.mxu0 0
    %813 = vmatmul.mubr.bf16.gmra.mxu0 %v734
    %v814 = vpop.f32.mrf.mxu0
    %v815 = vadd.f32 0.0, %v814
    %v816 = vpop.f32.mrf.mxu0
    %v817 = vpop.f32.mrf.mxu0
    %v818 = vadd.f32 0.0, %v817
    %v819 = vpop.f32.mrf.mxu0
    %820 = vmatprep.mubr.bf16.mxu0 0
    %821 = vmatmul.mubr.bf16.gmra.mxu0 %v737
    %v822 = vpop.f32.mrf.mxu0
    %v823 = vadd.f32 0.0, %v822
    %v824 = vpop.f32.mrf.mxu0
    %v825 = vpop.f32.mrf.mxu0
    %v826 = vadd.f32 0.0, %v825
    %v827 = vpop.f32.mrf.mxu0
    %828 = vmatprep.mubr.bf16.mxu0 0
    %829 = vmatmul.mubr.bf16.gmra.mxu0 %v740
    %v830 = vpop.f32.mrf.mxu0
    %v831 = vadd.f32 0.0, %v830
    %v832 = vpop.f32.mrf.mxu0
    %v833 = vpop.f32.mrf.mxu0
    %v834 = vadd.f32 0.0, %v833
    %v835 = vpop.f32.mrf.mxu0
    %836 = vmatprep.mubr.bf16.mxu0 0
    %837 = vmatmul.mubr.bf16.gmra.mxu0 %v743
    %v838 = vpop.f32.mrf.mxu0
    %v839 = vadd.f32 0.0, %v838
    %v840 = vpop.f32.mrf.mxu0
    %v841 = vpop.f32.mrf.mxu0
    %v842 = vadd.f32 0.0, %v841
    %v843 = vpop.f32.mrf.mxu0
    %844 = vdwg.mxu0
    %845 = vmax.xlane.f32.xlu0 %v783
    %v846 = vpop.xlane.xlu0 %845
    %847 = vmax.xlane.f32.xlu0 %v786
    %v848 = vpop.xlane.xlu0 %847
    %849 = vmax.xlane.f32.xlu0 %v791
    %v850 = vpop.xlane.xlu0 %849
    %851 = vmax.xlane.f32.xlu0 %v794
    %v852 = vpop.xlane.xlu0 %851
    %853 = vmax.xlane.f32.xlu0 %v799
    %v854 = vpop.xlane.xlu0 %853
    %855 = vmax.xlane.f32.xlu0 %v802
    %v856 = vpop.xlane.xlu0 %855
    %857 = vmax.xlane.f32.xlu0 %v807
    %v858 = vpop.xlane.xlu0 %857
    %859 = vmax.xlane.f32.xlu0 %v810
    %v860 = vpop.xlane.xlu0 %859
    %861 = vmax.xlane.f32.xlu0 %v815
    %v862 = vpop.xlane.xlu0 %861
    %863 = vmax.xlane.f32.xlu0 %v818
    %v864 = vpop.xlane.xlu0 %863
    %865 = vmax.xlane.f32.xlu0 %v823
    %v866 = vpop.xlane.xlu0 %865
    %867 = vmax.xlane.f32.xlu0 %v826
    %v868 = vpop.xlane.xlu0 %867
    %869 = vmax.xlane.f32.xlu0 %v831
    %v870 = vpop.xlane.xlu0 %869
    %871 = vmax.xlane.f32.xlu0 %v834
    %v872 = vpop.xlane.xlu0 %871
    %873 = vmax.xlane.f32.xlu0 %v839
    %v874 = vpop.xlane.xlu0 %873
    %875 = vmax.xlane.f32.xlu0 %v842
    %v876 = vpop.xlane.xlu0 %875
    %v877 = vsub.f32 %v783, %v846
    %v878 = vsub.f32 %v786, %v848
    %v879 = vsub.f32 %v791, %v850
    %v880 = vsub.f32 %v794, %v852
    %v881 = vsub.f32 %v799, %v854
    %v882 = vsub.f32 %v802, %v856
    %v883 = vsub.f32 %v807, %v858
    %v884 = vsub.f32 %v810, %v860
    %v885 = vsub.f32 %v815, %v862
    %v886 = vsub.f32 %v818, %v864
    %v887 = vsub.f32 %v823, %v866
    %v888 = vsub.f32 %v826, %v868
    %v889 = vsub.f32 %v831, %v870
    %v890 = vsub.f32 %v834, %v872
    %v891 = vsub.f32 %v839, %v874
    %v892 = vsub.f32 %v842, %v876
    %v893 = vmul.f32 %v877, 1.442695
    %v894 = vpow.pop %v893
    %v895 = vmul.f32 %v878, 1.442695
    %v896 = vpow.pop %v895
    %v897 = vmul.f32 %v879, 1.442695
    %v898 = vpow.pop %v897
    %v899 = vmul.f32 %v880, 1.442695
    %v900 = vpow.pop %v899
    %v901 = vmul.f32 %v881, 1.442695
    %v902 = vpow.pop %v901
    %v903 = vmul.f32 %v882, 1.442695
    %v904 = vpow.pop %v903
    %v905 = vmul.f32 %v883, 1.442695
    %v906 = vpow.pop %v905
    %v907 = vmul.f32 %v884, 1.442695
    %v908 = vpow.pop %v907
    %v909 = vmul.f32 %v885, 1.442695
    %v910 = vpow.pop %v909
    %v911 = vmul.f32 %v886, 1.442695
    %v912 = vpow.pop %v911
    %v913 = vmul.f32 %v887, 1.442695
    %v914 = vpow.pop %v913
    %v915 = vmul.f32 %v888, 1.442695
    %v916 = vpow.pop %v915
    %v917 = vmul.f32 %v889, 1.442695
    %v918 = vpow.pop %v917
    %v919 = vmul.f32 %v890, 1.442695
    %v920 = vpow.pop %v919
    %v921 = vmul.f32 %v891, 1.442695
    %v922 = vpow.pop %v921
    %v923 = vmul.f32 %v892, 1.442695
    %v924 = vpow.pop %v923
    %925 = vadd.xlane.f32.xlu0 %v894
    %v926 = vpop.xlane.xlu0 %925
    %927 = vadd.xlane.f32.xlu0 %v896
    %v928 = vpop.xlane.xlu0 %927
    %929 = vadd.xlane.f32.xlu0 %v898
    %v930 = vpop.xlane.xlu0 %929
    %931 = vadd.xlane.f32.xlu0 %v900
    %v932 = vpop.xlane.xlu0 %931
    %933 = vadd.xlane.f32.xlu0 %v902
    %v934 = vpop.xlane.xlu0 %933
    %935 = vadd.xlane.f32.xlu0 %v904
    %v936 = vpop.xlane.xlu0 %935
    %937 = vadd.xlane.f32.xlu0 %v906
    %v938 = vpop.xlane.xlu0 %937
    %939 = vadd.xlane.f32.xlu0 %v908
    %v940 = vpop.xlane.xlu0 %939
    %941 = vadd.xlane.f32.xlu0 %v910
    %v942 = vpop.xlane.xlu0 %941
    %943 = vadd.xlane.f32.xlu0 %v912
    %v944 = vpop.xlane.xlu0 %943
    %945 = vadd.xlane.f32.xlu0 %v914
    %v946 = vpop.xlane.xlu0 %945
    %947 = vadd.xlane.f32.xlu0 %v916
    %v948 = vpop.xlane.xlu0 %947
    %949 = vadd.xlane.f32.xlu0 %v918
    %v950 = vpop.xlane.xlu0 %949
    %951 = vadd.xlane.f32.xlu0 %v920
    %v952 = vpop.xlane.xlu0 %951
    %953 = vadd.xlane.f32.xlu0 %v922
    %v954 = vpop.xlane.xlu0 %953
    %955 = vadd.xlane.f32.xlu0 %v924
    %v956 = vpop.xlane.xlu0 %955
    %v957 = vpack.c.bf16 %v896, %v894
    %v958 = vpack.c.bf16 %v900, %v898
    %v959 = vpack.c.bf16 %v904, %v902
    %v960 = vpack.c.bf16 %v908, %v906
    %v961 = vpack.c.bf16 %v912, %v910
    %v962 = vpack.c.bf16 %v916, %v914
    %v963 = vpack.c.bf16 %v920, %v918
    %v964 = vpack.c.bf16 %v924, %v922
    %v965 = vpack.c.bf16 %v698, %v698
    %966 = vmatprep.subr.bf16.mxu0 0
    %967 = vmatpush1.bf16.xpose.msra.mxu0 0
    %968 = vmatprep.subr.bf16.mxu0 0
    %969 = vmatpush1.bf16.xpose.msra.mxu0 0
    %970 = vmatprep.subr.bf16.mxu0 0
    %971 = vmatpush1.bf16.xpose.msra.mxu0 0
    %972 = vmatprep.subr.bf16.mxu0 0
    %973 = vmatpush1.bf16.xpose.msra.mxu0 0
    %974 = vmatprep.subr.bf16.mxu0 0
    %975 = vmatpush1.bf16.xpose.msra.mxu0 0
    %976 = vmatprep.subr.bf16.mxu0 0
    %977 = vmatpush1.bf16.xpose.msra.mxu0 0
    %978 = vmatprep.subr.bf16.mxu0 0
    %979 = vmatpush1.bf16.xpose.msra.mxu0 0
    %980 = vmatprep.subr.bf16.mxu0 0
    %981 = vmatpush1.bf16.xpose.msra.mxu0 %v965
    %982 = vmatprep.subr.bf16.mxu0 0
    %983 = vmatpush2.bf16.xpose.msra.mxu0 0
    %984 = vmatprep.subr.bf16.mxu0 0
    %985 = vmatpush2.bf16.xpose.msra.mxu0 0
    %986 = vmatprep.subr.bf16.mxu0 0
    %987 = vmatpush2.bf16.xpose.msra.mxu0 0
    %988 = vmatprep.subr.bf16.mxu0 0
    %989 = vmatpush2.bf16.xpose.msra.mxu0 0
    %990 = vmatprep.subr.bf16.mxu0 0
    %991 = vmatpush2.bf16.xpose.msra.mxu0 0
    %992 = vmatprep.subr.bf16.mxu0 0
    %993 = vmatpush2.bf16.xpose.msra.mxu0 0
    %994 = vmatprep.subr.bf16.mxu0 0
    %995 = vmatpush2.bf16.xpose.msra.mxu0 0
    %996 = vmatprep.subr.bf16.mxu0 0
    %997 = vmatpush2.bf16.xpose.msra.mxu0 0
    %998 = vmatprep.mubr.bf16.mxu0 0
    %999 = vmatmul.mubr.bf16.gmra.mxu0 %v957
    %v1000 = vpop.f32.mrf.mxu0
    %v1001 = vadd.f32 0.0, %v1000
    %v1002 = vpop.f32.mrf.mxu0
    %v1003 = vpop.f32.mrf.mxu0
    %v1004 = vadd.f32 0.0, %v1003
    %v1005 = vpop.f32.mrf.mxu0
    %1006 = vmatprep.mubr.bf16.mxu0 0
    %1007 = vmatmul.mubr.bf16.gmra.mxu0 %v958
    %v1008 = vpop.f32.mrf.mxu0
    %v1009 = vadd.f32 0.0, %v1008
    %v1010 = vpop.f32.mrf.mxu0
    %v1011 = vpop.f32.mrf.mxu0
    %v1012 = vadd.f32 0.0, %v1011
    %v1013 = vpop.f32.mrf.mxu0
    %1014 = vmatprep.mubr.bf16.mxu0 0
    %1015 = vmatmul.mubr.bf16.gmra.mxu0 %v959
    %v1016 = vpop.f32.mrf.mxu0
    %v1017 = vadd.f32 0.0, %v1016
    %v1018 = vpop.f32.mrf.mxu0
    %v1019 = vpop.f32.mrf.mxu0
    %v1020 = vadd.f32 0.0, %v1019
    %v1021 = vpop.f32.mrf.mxu0
    %1022 = vmatprep.mubr.bf16.mxu0 0
    %1023 = vmatmul.mubr.bf16.gmra.mxu0 %v960
    %v1024 = vpop.f32.mrf.mxu0
    %v1025 = vadd.f32 0.0, %v1024
    %v1026 = vpop.f32.mrf.mxu0
    %v1027 = vpop.f32.mrf.mxu0
    %v1028 = vadd.f32 0.0, %v1027
    %v1029 = vpop.f32.mrf.mxu0
    %1030 = vmatprep.mubr.bf16.mxu0 0
    %1031 = vmatmul.mubr.bf16.gmra.mxu0 %v961
    %v1032 = vpop.f32.mrf.mxu0
    %v1033 = vadd.f32 0.0, %v1032
    %v1034 = vpop.f32.mrf.mxu0
    %v1035 = vpop.f32.mrf.mxu0
    %v1036 = vadd.f32 0.0, %v1035
    %v1037 = vpop.f32.mrf.mxu0
    %1038 = vmatprep.mubr.bf16.mxu0 0
    %1039 = vmatmul.mubr.bf16.gmra.mxu0 %v962
    %v1040 = vpop.f32.mrf.mxu0
    %v1041 = vadd.f32 0.0, %v1040
    %v1042 = vpop.f32.mrf.mxu0
    %v1043 = vpop.f32.mrf.mxu0
    %v1044 = vadd.f32 0.0, %v1043
    %v1045 = vpop.f32.mrf.mxu0
    %1046 = vmatprep.mubr.bf16.mxu0 0
    %1047 = vmatmul.mubr.bf16.gmra.mxu0 %v963
    %v1048 = vpop.f32.mrf.mxu0
    %v1049 = vadd.f32 0.0, %v1048
    %v1050 = vpop.f32.mrf.mxu0
    %v1051 = vpop.f32.mrf.mxu0
    %v1052 = vadd.f32 0.0, %v1051
    %v1053 = vpop.f32.mrf.mxu0
    %1054 = vmatprep.mubr.bf16.mxu0 0
    %1055 = vmatmul.mubr.bf16.gmra.mxu0 %v964
    %v1056 = vpop.f32.mrf.mxu0
    %v1057 = vadd.f32 0.0, %v1056
    %v1058 = vpop.f32.mrf.mxu0
    %v1059 = vpop.f32.mrf.mxu0
    %v1060 = vadd.f32 0.0, %v1059
    %v1061 = vpop.f32.mrf.mxu0
    %1062 = vdwg.mxu0
    %v1063 = vrcp.pop %v926
    %v1064 = vrcp.pop %v928
    %v1065 = vrcp.pop %v930
    %v1066 = vrcp.pop %v932
    %v1067 = vrcp.pop %v934
    %v1068 = vrcp.pop %v936
    %v1069 = vrcp.pop %v938
    %v1070 = vrcp.pop %v940
    %v1071 = vrcp.pop %v942
    %v1072 = vrcp.pop %v944
    %v1073 = vrcp.pop %v946
    %v1074 = vrcp.pop %v948
    %v1075 = vrcp.pop %v950
    %v1076 = vrcp.pop %v952
    %v1077 = vrcp.pop %v954
    %v1078 = vrcp.pop %v956
    %v1079 = vmul.f32 %v1001, %v1063
    %v1080 = vmul.f32 %v1004, %v1064
    %v1081 = vmul.f32 %v1009, %v1065
    %v1082 = vmul.f32 %v1012, %v1066
    %v1083 = vmul.f32 %v1017, %v1067
    %v1084 = vmul.f32 %v1020, %v1068
    %v1085 = vmul.f32 %v1025, %v1069
    %v1086 = vmul.f32 %v1028, %v1070
    %v1087 = vmul.f32 %v1033, %v1071
    %v1088 = vmul.f32 %v1036, %v1072
    %v1089 = vmul.f32 %v1041, %v1073
    %v1090 = vmul.f32 %v1044, %v1074
    %v1091 = vmul.f32 %v1049, %v1075
    %v1092 = vmul.f32 %v1052, %v1076
    %v1093 = vmul.f32 %v1057, %v1077
    %v1094 = vmul.f32 %v1060, %v1078
    %v1095 = vpack.c.bf16 %v1080, %v1079
    %v1096 = vpack.c.bf16 %v1082, %v1081
    %v1097 = vpack.c.bf16 %v1084, %v1083
    %v1098 = vpack.c.bf16 %v1086, %v1085
    %v1099 = vpack.c.bf16 %v1088, %v1087
    %v1100 = vpack.c.bf16 %v1090, %v1089
    %v1101 = vpack.c.bf16 %v1092, %v1091
    %v1102 = vpack.c.bf16 %v1094, %v1093
    %v1103 = vld [vmem:[%s4] sm:$0xff]
    %v1104 = vld [vmem:[%s4 + $0x8] sm:$0xff]
    %1106 = vset.pattern.permute.xlu0 0
    %1107 = vperm.xlu0 %1106, %v1103
    %v1108 = vpop.permute.xlu0 %1107
    %1111 = vset.pattern.permute.xlu0 0
    %1112 = vperm.xlu0 %1111, %v1104
    %v1113 = vpop.permute.xlu0 %1112
    %v1116 = vsel %vm139, %v1095, 0
    %v1119 = vsel %vm139, %v1096, 0
    %v1122 = vsel %vm139, %v1097, 0
    %v1125 = vsel %vm139, %v1098, 0
    %v1128 = vsel %vm139, %v1099, 0
    %v1131 = vsel %vm139, %v1100, 0
    %v1134 = vsel %vm139, %v1101, 0
    %v1137 = vsel %vm139, %v1102, 0
    %1139 = vmatprep.subr.bf16.mxu0 0
    %1140 = vmatpush1.bf16.xpose.msra.mxu0 %v1137
    %1141 = vmatprep.subr.bf16.mxu0 0
    %1142 = vmatpush1.bf16.xpose.msra.mxu0 %v1134
    %1143 = vmatprep.subr.bf16.mxu0 0
    %1144 = vmatpush1.bf16.xpose.msra.mxu0 %v1131
    %1145 = vmatprep.subr.bf16.mxu0 0
    %1146 = vmatpush1.bf16.xpose.msra.mxu0 %v1128
    %1147 = vmatprep.subr.bf16.mxu0 0
    %1148 = vmatpush1.bf16.xpose.msra.mxu0 %v1125
    %1149 = vmatprep.subr.bf16.mxu0 0
    %1150 = vmatpush1.bf16.xpose.msra.mxu0 %v1122
    %1151 = vmatprep.subr.bf16.mxu0 0
    %1152 = vmatpush1.bf16.xpose.msra.mxu0 %v1119
    %1153 = vmatprep.subr.bf16.mxu0 0
    %1154 = vmatpush1.bf16.xpose.msra.mxu0 %v1116
    %1155 = vmatprep.subr.bf16.mxu0 0
    %1156 = vmatpush2.bf16.xpose.msra.mxu0 0
    %1157 = vmatprep.subr.bf16.mxu0 0
    %1158 = vmatpush2.bf16.xpose.msra.mxu0 0
    %1159 = vmatprep.subr.bf16.mxu0 0
    %1160 = vmatpush2.bf16.xpose.msra.mxu0 0
    %1161 = vmatprep.subr.bf16.mxu0 0
    %1162 = vmatpush2.bf16.xpose.msra.mxu0 0
    %1163 = vmatprep.subr.bf16.mxu0 0
    %1164 = vmatpush2.bf16.xpose.msra.mxu0 0
    %1165 = vmatprep.subr.bf16.mxu0 0
    %1166 = vmatpush2.bf16.xpose.msra.mxu0 0
    %1167 = vmatprep.subr.bf16.mxu0 0
    %1168 = vmatpush2.bf16.xpose.msra.mxu0 0
    %1169 = vmatprep.subr.bf16.mxu0 0
    %1170 = vmatpush2.bf16.xpose.msra.mxu0 0
    %1171 = vmatprep.mubr.bf16.mxu0 0
    %1172 = vmatmul.mubr.bf16.gmra.mxu0 %v536
    %v1173 = vpop.f32.mrf.mxu0
    %v1174 = vadd.f32 %v1108, %v1173
    %v1175 = vpop.f32.mrf.mxu0
    %v1176 = vpop.f32.mrf.mxu0
    %v1177 = vadd.f32 %v1113, %v1176
    %v1178 = vpop.f32.mrf.mxu0
    %1179 = vdwg.mxu0
    %v1180 = vadd.f32 %v1174, %v634
    %v1181 = vadd.f32 %v1177, %v635
    %s1182 = sadd.s32 %s605, 1
    %s1183 = smul.u32 %s1182, 16
    %s1184 = scalar_lea.vmem [#allocation2], %s1183
    %1185 = vst [vmem:[%s1184] sm:$0xff] %v1180
    %1186 = vst [vmem:[%s1184 + $0x8] sm:$0xff] %v1181
    %v1187 = vld [vmem:[#allocation3] sm:$0xff]
    %v1188 = vld [vmem:[#allocation3 + $0x8] sm:$0xff]
    %1189 = vadd.xlane.f32.xlu0 %v1180
    %v1190 = vpop.xlane.xlu0 %1189
    %1191 = vadd.xlane.f32.xlu0 %v1181
    %v1192 = vpop.xlane.xlu0 %1191
    %v1193 = vadd.f32 %v1187, %v1190
    %v1194 = vadd.f32 %v1188, %v1192
    %1195 = vst.msk [vmem:[#allocation3] sm:$0xff] %vm618, %v1193
    %1196 = vst.msk [vmem:[#allocation3 + $0x8] sm:$0xff] %vm618, %v1194
    %v1197 = vld [vmem:[#allocation4] sm:$0xff]
    %v1198 = vld [vmem:[#allocation4 + $0x8] sm:$0xff]
    %v1199 = vmul.f32 %v1180, %v1180
    %v1200 = vmul.f32 %v1181, %v1181
    %1201 = vadd.xlane.f32.xlu0 %v1199
    %v1202 = vpop.xlane.xlu0 %1201
    %1203 = vadd.xlane.f32.xlu0 %v1200
    %v1204 = vpop.xlane.xlu0 %1203
    %v1205 = vadd.f32 %v1197, %v1202
    %v1206 = vadd.f32 %v1198, %v1204
    %1207 = vst.msk [vmem:[#allocation4] sm:$0xff] %vm618, %v1205
    %1208 = vst.msk [vmem:[#allocation4 + $0x8] sm:$0xff] %vm618, %v1206
    // Predicated region
    $region34: #{tpu_custom_call.1} parent=1 // pred_check
      %p1209 = pneg %p28
    $region35: #{tpu_custom_call.1} parent=1 // pred_check_branch
      %1211 = sbr.rel (%p1209) target = $region37
    $region36: #{tpu_custom_call.1} parent=1 // pred_region
      %v1212 = vld [vmem:[#allocation3] sm:$0xff]
      %v1213 = vld [vmem:[#allocation3 + $0x8] sm:$0xff]
      %v1214 = vrcp.pop 256.0
      %v1215 = vmul.f32 %v1212, %v1214
      %v1216 = vmul.f32 %v1213, %v1214
      %v1217 = vld [vmem:[#allocation4] sm:$0xff]
      %v1218 = vld [vmem:[#allocation4 + $0x8] sm:$0xff]
      %v1219 = vmul.f32 %v1217, %v1214
      %v1220 = vmul.f32 %v1218, %v1214
      %v1221 = vmul.f32 %v1215, %v1215
      %v1222 = vmul.f32 %v1216, %v1216
      %v1223 = vsub.f32 %v1219, %v1221
      %v1224 = vsub.f32 %v1220, %v1222
      %v1225 = vmax.f32 %v1223, 0.0
      %v1226 = vmax.f32 %v1224, 0.0
      %v1227 = vadd.f32 %v1225, 1e-05
      %v1228 = vadd.f32 %v1226, 1e-05
      %v1229 = vrsqrt.pop %v1227
      %v1230 = vrsqrt.pop %v1228
      %v1231 = vld [vmem:[%s5] sm:$0xff]
      %v1232 = vld [vmem:[%s5 + $0x8] sm:$0xff]
      %v1233 = vmul.f32 %v1231, %v1229
      %v1234 = vmul.f32 %v1232, %v1230
      %v1235 = vld [vmem:[%s6] sm:$0xff]
      %v1236 = vld [vmem:[%s6 + $0x8] sm:$0xff]
      %v1237 = vmul.f32 %v1215, %v1233
      %v1238 = vmul.f32 %v1216, %v1234
      %v1239 = vsub.f32 %v1235, %v1237
      %v1240 = vsub.f32 %v1236, %v1238
      %v1241 = vld [vmem:[#allocation2] sm:$0xff]
      %v1242 = vld [vmem:[#allocation2 + $0x8] sm:$0xff]
      %1244 = vset.pattern.permute.xlu0 0
      %1245 = vperm.xlu0 %1244, %v1233
      %v1246 = vpop.permute.xlu0 %1245
      %1249 = vset.pattern.permute.xlu0 0
      %1250 = vperm.xlu0 %1249, %v1234
      %v1251 = vpop.permute.xlu0 %1250
      %v1253 = vmul.f32 %v1241, %v1246
      %v1254 = vmul.f32 %v1242, %v1251
      %1256 = vset.pattern.permute.xlu0 0
      %1257 = vperm.xlu0 %1256, %v1239
      %v1258 = vpop.permute.xlu0 %1257
      %1261 = vset.pattern.permute.xlu0 0
      %1262 = vperm.xlu0 %1261, %v1240
      %v1263 = vpop.permute.xlu0 %1262
      %v1265 = vadd.f32 %v1253, %v1258
      %v1266 = vadd.f32 %v1254, %v1263
      %1267 = vst [vmem:[#allocation5] sm:$0xff] %v1265
      %1268 = vst [vmem:[#allocation5 + $0x8] sm:$0xff] %v1266
      %s1269 = scalar_lea.vmem [#allocation2], 16
      %v1270 = vld [vmem:[%s1269] sm:$0xff]
      %v1271 = vld [vmem:[%s1269 + $0x8] sm:$0xff]
      %v1272 = vmul.f32 %v1270, %v1246
      %v1273 = vmul.f32 %v1271, %v1251
      %v1274 = vadd.f32 %v1272, %v1258
      %v1275 = vadd.f32 %v1273, %v1263
      %s1276 = scalar_lea.vmem [#allocation5], 16
      %1277 = vst [vmem:[%s1276] sm:$0xff] %v1274
      %1278 = vst [vmem:[%s1276 + $0x8] sm:$0xff] %v1275
    $region37: #{tpu_custom_call.1} parent=1 // pred_fallthru
      _
    // Predicated region
    $region38: #{tpu_custom_call.1} parent=1 // pred_check
      _
    $region39: #{tpu_custom_call.1} parent=1 // pred_check_branch
      %1280 = sbr.rel (0) target = $region41
    $region40: #{tpu_custom_call.1} parent=1 // pred_region
      %s1282 = ssub.s32 512, 512
      %1283 = vsyncadd [#allocation6], %s1282
      %s1284 = sshll.u32 [#allocation5], 4
      %s1285 = int_to_ptr.vmem [resolvable:$true] %s1284
      %1290 = dma.vmem_to_hbm [thread:$0]  %s1285, 512, %s7, [#allocation6], 128, 128, 8
    $region41: #{tpu_custom_call.1} parent=1 // pred_fallthru
      _
    // Predicated region
    $region42: #{tpu_custom_call.1} parent=1 // pred_check
      _
    $region43: #{tpu_custom_call.1} parent=1 // pred_check_branch
      %1292 = sbr.rel (0) target = $region45
    $region44: #{tpu_custom_call.1} parent=1 // pred_region
      %1293 = dma.done [#allocation6], 512
    $region45: #{tpu_custom_call.1} parent=1 // pred_fallthru
      _
    %1294 = vsyncpa [#allocation6], 1

</llo_original>
